<compile_context>
chip_gen: v7x
topology: tpu7x:2x2x1
jax: 0.10.0
libtpu: 0.0.40
codegen_flags: <defaults>
</compile_context>

<pallas_src>
import math
import functools

import jax
import jax.numpy as jnp
from jax import lax
from jax.experimental import pallas as pl
from jax.experimental.pallas import tpu as pltpu

GROUPS = 32      # nn.GroupNorm(32, channels)
EPS = 1e-5       # PyTorch GroupNorm default eps


def attention_block_kernel(x_ref, a_gc_ref, a_cg_ref, gamma_ref, beta_ref,
                           wqkv_ref, wproj_ref, bproj_ref, o_ref, h_slab_ref,
                           *, num_heads, q_tile):
    x = x_ref[...]                                   # (C, HW) f32
    C, HW = x.shape
    Cg = C // GROUPS
    Ch = C // num_heads
    nqt = HW // q_tile

    # ---- GroupNorm(32, C): group stats from per-channel sums (f32) ----
    s = jnp.sum(x, axis=1, keepdims=True)            # (C, 1)
    ss = jnp.sum(x * x, axis=1, keepdims=True)       # (C, 1)
    inv_denom = 1.0 / float(Cg * HW)
    g_mean = jnp.dot(a_gc_ref[...], s, preferred_element_type=jnp.float32) * inv_denom   # (G, 1)
    g_msq = jnp.dot(a_gc_ref[...], ss, preferred_element_type=jnp.float32) * inv_denom   # (G, 1)
    g_var = jnp.maximum(g_msq - g_mean * g_mean, 0.0)         # biased var, clamped >= 0
    g_inv = lax.rsqrt(g_var + EPS)

    mean_c = jnp.dot(a_cg_ref[...], g_mean, preferred_element_type=jnp.float32)  # (C, 1)
    inv_c = jnp.dot(a_cg_ref[...], g_inv, preferred_element_type=jnp.float32)    # (C, 1)
    scale_c = inv_c * gamma_ref[...]                  # fused affine: xn = x*scale + shift
    shift_c = beta_ref[...] - mean_c * scale_c
    xn = (x * scale_c + shift_c).astype(jnp.bfloat16)         # (C, HW) bf16

    # ---- qkv 1x1 conv (attention scale already folded into q/k rows of wqkv) ----
    qkv = jnp.dot(wqkv_ref[...], xn, preferred_element_type=jnp.float32)   # (3C, HW) f32

    # Per-head bf16 slices; transpose only the small (Ch, HW) k slice, once per head.
    q_heads, kt_heads, v_heads = [], [], []
    for h in range(num_heads):
        base = 3 * Ch * h
        q_heads.append(qkv[base:base + Ch].astype(jnp.bfloat16))               # (Ch, HW)
        kt_heads.append(qkv[base + Ch:base + 2 * Ch].T.astype(jnp.bfloat16))   # (HW, Ch)
        v_heads.append(qkv[base + 2 * Ch:base + 3 * Ch].astype(jnp.bfloat16))  # (Ch, HW)

    wproj = wproj_ref[...]                            # (C, C) bf16
    bproj = bproj_ref[...]                            # (C, 1) f32

    # ---- attention + proj + residual, tiled over the query axis ----
    for qt in range(nqt):
        c0, c1 = qt * q_tile, (qt + 1) * q_tile
        for h in range(num_heads):
            qs = q_heads[h][:, c0:c1]                                       # (Ch, TQ) bf16
            # scores^T[s, t] = sum_c k[c, s] * q[c, t]   (scale pre-folded)
            st = jnp.dot(kt_heads[h], qs, preferred_element_type=jnp.float32)  # (HW, TQ) f32
            st = st - jnp.max(st, axis=0, keepdims=True)
            e = jnp.exp(st)
            p = (e * pl.reciprocal(jnp.sum(e, axis=0, keepdims=True),
                                   approx=True)).astype(jnp.bfloat16)       # (HW, TQ)
            # head_out[c, t] = sum_s v[c, s] * p[s, t]   (no transpose of p)
            ho = jnp.dot(v_heads[h], p, preferred_element_type=jnp.float32)  # (Ch, TQ) f32
            h_slab_ref[h * Ch:(h + 1) * Ch, :] = ho.astype(jnp.bfloat16)
        out_t = jnp.dot(wproj, h_slab_ref[...],
                        preferred_element_type=jnp.float32)                  # (C, TQ) f32
        o_ref[:, c0:c1] = out_t + bproj + x[:, c0:c1]


def _pick_q_tile(hw):
    if hw <= 512:
        return hw
    for t in (512, 256, 128):
        if hw % t == 0:
            return t
    return hw  # TODO(synk): pad ragged HW instead of falling back to a full-width tile


def _vmem_limit_bytes(C, HW, TQ):
    f32, b16 = 4, 2
    est = 0
    est += 2 * 2 * C * HW * f32                                   # x + out blocks, double-buffered
    est += 2 * (4 * C * C * b16 + (2 * GROUPS * C + 3 * C) * f32)  # weights / small params
    est += C * HW * b16                                           # xn (bf16)
    est += 3 * C * HW * (f32 + b16)                                # qkv f32 + per-head bf16 q/k^T/v
    est += 5 * HW * TQ * f32                                       # score / exp / prob working tiles
    est += C * TQ * b16                                            # head-output scratch slab
    est += 4 * (1 << 20)                                           # slack for compiler temporaries
    try:
        info = pltpu.get_tpu_info()
        cap = int(getattr(info, "vmem_capacity_bytes", 64 * (1 << 20)))
    except Exception:
        cap = 64 * (1 << 20)
    return int(min(max(est, 32 * (1 << 20)), int(cap * 0.9)))


def attention_block(x, gamma, beta, wqkv, wproj, bproj, *, num_heads=1):
    B, C, H, W = x.shape
    HW = H * W
    assert C % GROUPS == 0 and C % num_heads == 0
    Ch = C // num_heads
    TQ = _pick_q_tile(HW)

    xr = x.reshape(B, C, HW).astype(jnp.float32)
    gamma2 = gamma.reshape(C, 1).astype(jnp.float32)
    beta2 = beta.reshape(C, 1).astype(jnp.float32)

    # Fold the 1/Ch**0.25 attention scale into the q and k rows of the qkv weight.
    scale = 1.0 / math.sqrt(math.sqrt(Ch))
    row = jnp.arange(3 * C) % (3 * Ch)
    row_scale = jnp.where(row < 2 * Ch, scale, 1.0).astype(jnp.float32)
    wqkv2 = (wqkv.reshape(3 * C, C).astype(jnp.float32) * row_scale[:, None]).astype(jnp.bfloat16)

    wproj2 = wproj.reshape(C, C).astype(jnp.bfloat16)
    bproj2 = bproj.reshape(C, 1).astype(jnp.float32)

    # One-hot group membership matrices (reduce C->G, broadcast G->C), built once on host.
    ch_group = jnp.arange(C) // (C // GROUPS)
    a_gc = (ch_group[None, :] == jnp.arange(GROUPS)[:, None]).astype(jnp.float32)  # (G, C)
    a_cg = a_gc.T                                                                   # (C, G)

    const = lambda b: (0, 0)
    out = pl.pallas_call(
        functools.partial(attention_block_kernel, num_heads=num_heads, q_tile=TQ),
        out_shape=jax.ShapeDtypeStruct((B, C, HW), jnp.float32),
        grid_spec=pltpu.PrefetchScalarGridSpec(
            num_scalar_prefetch=0,
            grid=(B,),
            in_specs=[
                pl.BlockSpec((None, C, HW), lambda b: (b, 0, 0)),   # x
                pl.BlockSpec((GROUPS, C), const),                   # group reduce one-hot
                pl.BlockSpec((C, GROUPS), const),                   # group broadcast one-hot
                pl.BlockSpec((C, 1), const),                        # gamma
                pl.BlockSpec((C, 1), const),                        # beta
                pl.BlockSpec((3 * C, C), const),                    # qkv weight (scale folded)
                pl.BlockSpec((C, C), const),                        # proj weight
                pl.BlockSpec((C, 1), const),                        # proj bias
            ],
            out_specs=pl.BlockSpec((None, C, HW), lambda b: (b, 0, 0)),
            scratch_shapes=[pltpu.VMEM((C, TQ), jnp.bfloat16)],
        ),
        compiler_params=pltpu.CompilerParams(
            dimension_semantics=("parallel",),
            vmem_limit_bytes=_vmem_limit_bytes(C, HW, TQ),
        ),
    )(xr, a_gc, a_cg, gamma2, beta2, wqkv2, wproj2, bproj2)
    return out.reshape(B, C, H, W)


def ref_attention_block(x, gamma, beta, wqkv, wproj, bproj, *, num_heads=1):
    """Pure-JAX (f32) reference mirroring the PyTorch forward exactly."""
    B, C, H, W = x.shape
    xg = x.reshape(B, GROUPS, C // GROUPS, H, W)
    mean = xg.mean(axis=(2, 3, 4), keepdims=True)
    var = xg.var(axis=(2, 3, 4), keepdims=True)
    xn = ((xg - mean) / jnp.sqrt(var + EPS)).reshape(B, C, H, W)
    xn = xn * gamma[None, :, None, None] + beta[None, :, None, None]

    qkv = jnp.einsum('oc,bchw->bohw', wqkv, xn).reshape(B * num_heads, -1, H * W)
    Ch = C // num_heads
    q, k, v = qkv[:, :Ch], qkv[:, Ch:2 * Ch], qkv[:, 2 * Ch:]
    scale = 1.0 / math.sqrt(math.sqrt(Ch))
    attn = jnp.einsum('bct,bcs->bts', q * scale, k * scale)
    attn = jax.nn.softmax(attn, axis=-1)
    h = jnp.einsum('bts,bcs->bct', attn, v).reshape(B, C, H, W)
    h = jnp.einsum('oc,bchw->bohw', wproj, h) + bproj[None, :, None, None]
    return h + x


def _run_case(key, B, C, H, W, num_heads, tol):
    kx, kq, kp, kb, kg, kbt = jax.random.split(key, 6)
    x = jax.random.normal(kx, (B, C, H, W), dtype=jnp.float32)
    wqkv = 0.05 * jax.random.normal(kq, (3 * C, C), dtype=jnp.float32)   # Conv2d(C, 3C, 1, bias=False)
    wproj = 0.05 * jax.random.normal(kp, (C, C), dtype=jnp.float32)      # Conv2d(C, C, 1)
    bproj = 0.02 * jax.random.normal(kb, (C,), dtype=jnp.float32)
    gamma = 1.0 + 0.1 * jax.random.normal(kg, (C,), dtype=jnp.float32)   # GroupNorm affine
    beta = 0.1 * jax.random.normal(kbt, (C,), dtype=jnp.float32)

    out = attention_block(x, gamma, beta, wqkv, wproj, bproj, num_heads=num_heads)
    out = jax.block_until_ready(out)
    ref = jax.block_until_ready(
        ref_attention_block(x, gamma, beta, wqkv, wproj, bproj, num_heads=num_heads))
    assert out.shape == (B, C, H, W)
    max_err = float(jnp.max(jnp.abs(out - ref)))
    if max_err > tol:
        raise RuntimeError(
            f"mismatch vs reference (B={B},C={C},H={H},W={W},heads={num_heads}): "
            f"max abs err = {max_err}")


if __name__ == "__main__":
    key = jax.random.PRNGKey(0)
    k1, k2 = jax.random.split(key)
    # bf16 MXU operands with f32 accumulation -> tolerance relaxed vs the pure-f32 reference.
    _run_case(k1, B=2, C=64, H=8, W=8, num_heads=1, tol=2e-2)     # basic path, single q tile
    _run_case(k2, B=1, C=64, H=32, W=32, num_heads=2, tol=2e-2)   # multi-head + query tiling
    print("KERNEL_OK")
</pallas_src>

<mosaic_0001>
module attributes {stable_mosaic.version = 11 : i64} {
  func.func @attention_block_kernel(%arg0: i32, %arg1: memref<1x64x64xf32, #tpu.memory_space<vmem>>, %arg2: memref<32x64xf32, #tpu.memory_space<vmem>>, %arg3: memref<64x32xf32, #tpu.memory_space<vmem>>, %arg4: memref<64x1xf32, #tpu.memory_space<vmem>>, %arg5: memref<64x1xf32, #tpu.memory_space<vmem>>, %arg6: memref<192x64xbf16, #tpu.memory_space<vmem>>, %arg7: memref<64x64xbf16, #tpu.memory_space<vmem>>, %arg8: memref<64x1xf32, #tpu.memory_space<vmem>>, %arg9: memref<1x64x64xf32, #tpu.memory_space<vmem>>, %arg10: memref<64x64xbf16, #tpu.memory_space<vmem>>) attributes {dimension_semantics = [#tpu.dimension_semantics<parallel>], iteration_bounds = array<i64: 2>, scalar_prefetch = 0 : i64, scratch_operands = 1 : i64, tpu.core_type = #tpu.core_type<tc>, window_params = [{transform_indices = @transform_0, window_bounds = array<i64: 1, 64, 64>}, {pipeline_mode = #tpu.pipeline_mode<synchronous>, transform_indices = @transform_1, window_bounds = array<i64: 32, 64>}, {pipeline_mode = #tpu.pipeline_mode<synchronous>, transform_indices = @transform_2, window_bounds = array<i64: 64, 32>}, {pipeline_mode = #tpu.pipeline_mode<synchronous>, transform_indices = @transform_3, window_bounds = array<i64: 64, 1>}, {pipeline_mode = #tpu.pipeline_mode<synchronous>, transform_indices = @transform_4, window_bounds = array<i64: 64, 1>}, {pipeline_mode = #tpu.pipeline_mode<synchronous>, transform_indices = @transform_5, window_bounds = array<i64: 192, 64>}, {pipeline_mode = #tpu.pipeline_mode<synchronous>, transform_indices = @transform_6, window_bounds = array<i64: 64, 64>}, {pipeline_mode = #tpu.pipeline_mode<synchronous>, transform_indices = @transform_7, window_bounds = array<i64: 64, 1>}, {transform_indices = @transform_8, window_bounds = array<i64: 1, 64, 64>}]} {
    %c0 = arith.constant 0 : index
    %c0_0 = arith.constant 0 : index
    %c0_1 = arith.constant 0 : index
    %0 = vector.load %arg1[%c0, %c0_0, %c0_1] : memref<1x64x64xf32, #tpu.memory_space<vmem>>, vector<1x64x64xf32>
    %1 = vector.shape_cast %0 : vector<1x64x64xf32> to vector<64x64xf32>
    %cst = arith.constant dense<0.000000e+00> : vector<64xf32>
    %2 = vector.multi_reduction <add>, %1, %cst [1] : vector<64x64xf32> to vector<64xf32>
    %3 = vector.shape_cast %2 : vector<64xf32> to vector<64x1xf32>
    %4 = arith.mulf %1, %1 : vector<64x64xf32>
    %cst_2 = arith.constant dense<0.000000e+00> : vector<64xf32>
    %5 = vector.multi_reduction <add>, %4, %cst_2 [1] : vector<64x64xf32> to vector<64xf32>
    %6 = vector.shape_cast %5 : vector<64xf32> to vector<64x1xf32>
    %c0_3 = arith.constant 0 : index
    %c0_4 = arith.constant 0 : index
    %7 = vector.load %arg2[%c0_3, %c0_4] : memref<32x64xf32, #tpu.memory_space<vmem>>, vector<32x64xf32>
    %cst_5 = arith.constant dense<0.000000e+00> : vector<32x1xf32>
    %8 = tpu.matmul %7, %3, %cst_5 {dimension_numbers = #tpu.dot_dimension_numbers<[1], [0], [0], [1], [0, 0, 1, 1], [], []>} : vector<32x64xf32>, vector<64x1xf32>, vector<32x1xf32> -> vector<32x1xf32>
    %cst_6 = arith.constant 7.812500e-03 : f32
    %9 = vector.broadcast %cst_6 : f32 to vector<32x1xf32>
    %10 = arith.mulf %8, %9 : vector<32x1xf32>
    %c0_7 = arith.constant 0 : index
    %c0_8 = arith.constant 0 : index
    %11 = vector.load %arg2[%c0_7, %c0_8] : memref<32x64xf32, #tpu.memory_space<vmem>>, vector<32x64xf32>
    %cst_9 = arith.constant dense<0.000000e+00> : vector<32x1xf32>
    %12 = tpu.matmul %11, %6, %cst_9 {dimension_numbers = #tpu.dot_dimension_numbers<[1], [0], [0], [1], [0, 0, 1, 1], [], []>} : vector<32x64xf32>, vector<64x1xf32>, vector<32x1xf32> -> vector<32x1xf32>
    %cst_10 = arith.constant 7.812500e-03 : f32
    %13 = vector.broadcast %cst_10 : f32 to vector<32x1xf32>
    %14 = arith.mulf %12, %13 : vector<32x1xf32>
    %15 = arith.mulf %10, %10 : vector<32x1xf32>
    %16 = arith.subf %14, %15 : vector<32x1xf32>
    %cst_11 = arith.constant 0.000000e+00 : f32
    %17 = vector.broadcast %cst_11 : f32 to vector<32x1xf32>
    %18 = arith.maximumf %16, %17 : vector<32x1xf32>
    %cst_12 = arith.constant 9.99999974E-6 : f32
    %19 = vector.broadcast %cst_12 : f32 to vector<32x1xf32>
    %20 = arith.addf %18, %19 : vector<32x1xf32>
    %21 = math.rsqrt %20 : vector<32x1xf32>
    %c0_13 = arith.constant 0 : index
    %c0_14 = arith.constant 0 : index
    %22 = vector.load %arg3[%c0_13, %c0_14] : memref<64x32xf32, #tpu.memory_space<vmem>>, vector<64x32xf32>
    %cst_15 = arith.constant dense<0.000000e+00> : vector<64x1xf32>
    %23 = tpu.matmul %22, %10, %cst_15 {dimension_numbers = #tpu.dot_dimension_numbers<[1], [0], [0], [1], [0, 0, 1, 1], [], []>} : vector<64x32xf32>, vector<32x1xf32>, vector<64x1xf32> -> vector<64x1xf32>
    %c0_16 = arith.constant 0 : index
    %c0_17 = arith.constant 0 : index
    %24 = vector.load %arg3[%c0_16, %c0_17] : memref<64x32xf32, #tpu.memory_space<vmem>>, vector<64x32xf32>
    %cst_18 = arith.constant dense<0.000000e+00> : vector<64x1xf32>
    %25 = tpu.matmul %24, %21, %cst_18 {dimension_numbers = #tpu.dot_dimension_numbers<[1], [0], [0], [1], [0, 0, 1, 1], [], []>} : vector<64x32xf32>, vector<32x1xf32>, vector<64x1xf32> -> vector<64x1xf32>
    %c0_19 = arith.constant 0 : index
    %c0_20 = arith.constant 0 : index
    %26 = vector.load %arg4[%c0_19, %c0_20] : memref<64x1xf32, #tpu.memory_space<vmem>>, vector<64x1xf32>
    %27 = arith.mulf %25, %26 : vector<64x1xf32>
    %c0_21 = arith.constant 0 : index
    %c0_22 = arith.constant 0 : index
    %28 = vector.load %arg5[%c0_21, %c0_22] : memref<64x1xf32, #tpu.memory_space<vmem>>, vector<64x1xf32>
    %29 = arith.mulf %23, %27 : vector<64x1xf32>
    %30 = arith.subf %28, %29 : vector<64x1xf32>
    %31 = vector.broadcast %27 : vector<64x1xf32> to vector<64x64xf32>
    %32 = arith.mulf %1, %31 : vector<64x64xf32>
    %33 = vector.broadcast %30 : vector<64x1xf32> to vector<64x64xf32>
    %34 = arith.addf %32, %33 : vector<64x64xf32>
    %35 = arith.truncf %34 : vector<64x64xf32> to vector<64x64xbf16>
    %c0_23 = arith.constant 0 : index
    %c0_24 = arith.constant 0 : index
    %36 = vector.load %arg6[%c0_23, %c0_24] : memref<192x64xbf16, #tpu.memory_space<vmem>>, vector<192x64xbf16>
    %cst_25 = arith.constant dense<0.000000e+00> : vector<192x64xf32>
    %37 = tpu.matmul %36, %35, %cst_25 {dimension_numbers = #tpu.dot_dimension_numbers<[1], [0], [0], [1], [0, 0, 1, 1], [], []>} : vector<192x64xbf16>, vector<64x64xbf16>, vector<192x64xf32> -> vector<192x64xf32>
    %38 = vector.extract_strided_slice %37 {offsets = [0, 0], sizes = [64, 64], strides = [1, 1]} : vector<192x64xf32> to vector<64x64xf32>
    %39 = arith.truncf %38 : vector<64x64xf32> to vector<64x64xbf16>
    %40 = vector.extract_strided_slice %37 {offsets = [64, 0], sizes = [64, 64], strides = [1, 1]} : vector<192x64xf32> to vector<64x64xf32>
    %41 = tpu.transpose %40, [1, 0] : vector<64x64xf32> -> vector<64x64xf32>
    %42 = arith.truncf %41 : vector<64x64xf32> to vector<64x64xbf16>
    %43 = vector.extract_strided_slice %37 {offsets = [128, 0], sizes = [64, 64], strides = [1, 1]} : vector<192x64xf32> to vector<64x64xf32>
    %44 = arith.truncf %43 : vector<64x64xf32> to vector<64x64xbf16>
    %c0_26 = arith.constant 0 : index
    %c0_27 = arith.constant 0 : index
    %45 = vector.load %arg7[%c0_26, %c0_27] : memref<64x64xbf16, #tpu.memory_space<vmem>>, vector<64x64xbf16>
    %c0_28 = arith.constant 0 : index
    %c0_29 = arith.constant 0 : index
    %46 = vector.load %arg8[%c0_28, %c0_29] : memref<64x1xf32, #tpu.memory_space<vmem>>, vector<64x1xf32>
    %cst_30 = arith.constant dense<0.000000e+00> : vector<64x64xf32>
    %47 = tpu.matmul %42, %39, %cst_30 {dimension_numbers = #tpu.dot_dimension_numbers<[1], [0], [0], [1], [0, 0, 1, 1], [], []>} : vector<64x64xbf16>, vector<64x64xbf16>, vector<64x64xf32> -> vector<64x64xf32>
    %cst_31 = arith.constant dense<0xFF800000> : vector<64xf32>
    %48 = vector.multi_reduction <maximumf>, %47, %cst_31 [0] : vector<64x64xf32> to vector<64xf32>
    %49 = vector.shape_cast %48 : vector<64xf32> to vector<1x64xf32>
    %50 = vector.broadcast %49 : vector<1x64xf32> to vector<64x64xf32>
    %51 = arith.subf %47, %50 : vector<64x64xf32>
    %52 = math.exp %51 : vector<64x64xf32>
    %cst_32 = arith.constant dense<0.000000e+00> : vector<64xf32>
    %53 = vector.multi_reduction <add>, %52, %cst_32 [0] : vector<64x64xf32> to vector<64xf32>
    %54 = vector.shape_cast %53 : vector<64xf32> to vector<1x64xf32>
    %55 = tpu.reciprocal %54 {approx = true} : vector<1x64xf32> -> vector<1x64xf32>
    %56 = vector.broadcast %55 : vector<1x64xf32> to vector<64x64xf32>
    %57 = arith.mulf %52, %56 : vector<64x64xf32>
    %58 = arith.truncf %57 : vector<64x64xf32> to vector<64x64xbf16>
    %cst_33 = arith.constant dense<0.000000e+00> : vector<64x64xf32>
    %59 = tpu.matmul %44, %58, %cst_33 {dimension_numbers = #tpu.dot_dimension_numbers<[1], [0], [0], [1], [0, 0, 1, 1], [], []>} : vector<64x64xbf16>, vector<64x64xbf16>, vector<64x64xf32> -> vector<64x64xf32>
    %60 = arith.truncf %59 : vector<64x64xf32> to vector<64x64xbf16>
    %c0_34 = arith.constant 0 : index
    %c0_35 = arith.constant 0 : index
    %61 = vector.load %arg10[%c0_34, %c0_35] : memref<64x64xbf16, #tpu.memory_space<vmem>>, vector<64x64xbf16>
    tpu.vector_store %arg10[%c0_34, %c0_35], %60 {strides = array<i32>} : memref<64x64xbf16, #tpu.memory_space<vmem>>, vector<64x64xbf16>,
    %c0_36 = arith.constant 0 : index
    %c0_37 = arith.constant 0 : index
    %62 = vector.load %arg10[%c0_36, %c0_37] : memref<64x64xbf16, #tpu.memory_space<vmem>>, vector<64x64xbf16>
    %cst_38 = arith.constant dense<0.000000e+00> : vector<64x64xf32>
    %63 = tpu.matmul %45, %62, %cst_38 {dimension_numbers = #tpu.dot_dimension_numbers<[1], [0], [0], [1], [0, 0, 1, 1], [], []>} : vector<64x64xbf16>, vector<64x64xbf16>, vector<64x64xf32> -> vector<64x64xf32>
    %64 = vector.broadcast %46 : vector<64x1xf32> to vector<64x64xf32>
    %65 = arith.addf %63, %64 : vector<64x64xf32>
    %66 = arith.addf %65, %1 : vector<64x64xf32>
    %c0_39 = arith.constant 0 : index
    %c0_40 = arith.constant 0 : index
    %c0_41 = arith.constant 0 : index
    %67 = vector.load %arg9[%c0_39, %c0_40, %c0_41] : memref<1x64x64xf32, #tpu.memory_space<vmem>>, vector<1x64x64xf32>
    %68 = vector.shape_cast %67 : vector<1x64x64xf32> to vector<64x64xf32>
    %69 = vector.shape_cast %66 : vector<64x64xf32> to vector<1x64x64xf32>
    tpu.vector_store %arg9[%c0_39, %c0_40, %c0_41], %69 {strides = array<i32>} : memref<1x64x64xf32, #tpu.memory_space<vmem>>, vector<1x64x64xf32>,
    return
  }
  func.func @transform_0(%arg0: i32) -> (i32, i32, i32) {
    %c0_i32 = arith.constant 0 : i32
    %c0_i32_0 = arith.constant 0 : i32
    %c0_i32_1 = arith.constant 0 : i32
    return %arg0, %c0_i32, %c0_i32_0 : i32, i32, i32
  }
  func.func @transform_1(%arg0: i32) -> (i32, i32) {
    %c0_i32 = arith.constant 0 : i32
    %c0_i32_0 = arith.constant 0 : i32
    %c0_i32_1 = arith.constant 0 : i32
    return %c0_i32, %c0_i32_0 : i32, i32
  }
  func.func @transform_2(%arg0: i32) -> (i32, i32) {
    %c0_i32 = arith.constant 0 : i32
    %c0_i32_0 = arith.constant 0 : i32
    %c0_i32_1 = arith.constant 0 : i32
    return %c0_i32, %c0_i32_0 : i32, i32
  }
  func.func @transform_3(%arg0: i32) -> (i32, i32) {
    %c0_i32 = arith.constant 0 : i32
    %c0_i32_0 = arith.constant 0 : i32
    %c0_i32_1 = arith.constant 0 : i32
    return %c0_i32, %c0_i32_0 : i32, i32
  }
  func.func @transform_4(%arg0: i32) -> (i32, i32) {
    %c0_i32 = arith.constant 0 : i32
    %c0_i32_0 = arith.constant 0 : i32
    %c0_i32_1 = arith.constant 0 : i32
    return %c0_i32, %c0_i32_0 : i32, i32
  }
  func.func @transform_5(%arg0: i32) -> (i32, i32) {
    %c0_i32 = arith.constant 0 : i32
    %c0_i32_0 = arith.constant 0 : i32
    %c0_i32_1 = arith.constant 0 : i32
    return %c0_i32, %c0_i32_0 : i32, i32
  }
  func.func @transform_6(%arg0: i32) -> (i32, i32) {
    %c0_i32 = arith.constant 0 : i32
    %c0_i32_0 = arith.constant 0 : i32
    %c0_i32_1 = arith.constant 0 : i32
    return %c0_i32, %c0_i32_0 : i32, i32
  }
  func.func @transform_7(%arg0: i32) -> (i32, i32) {
    %c0_i32 = arith.constant 0 : i32
    %c0_i32_0 = arith.constant 0 : i32
    %c0_i32_1 = arith.constant 0 : i32
    return %c0_i32, %c0_i32_0 : i32, i32
  }
  func.func @transform_8(%arg0: i32) -> (i32, i32, i32) {
    %c0_i32 = arith.constant 0 : i32
    %c0_i32_0 = arith.constant 0 : i32
    %c0_i32_1 = arith.constant 0 : i32
    return %arg0, %c0_i32, %c0_i32_0 : i32, i32, i32
  }
}

</mosaic_0001>

<llo_original>
// kernel: tpu_custom_call.1
$region0: #{tpu_custom_call.1}
  #allocation0 [shape = 'u32[]', space=smem, size = 0x4, offset = 0x4, fixed_abs, tag = 'smem constant byte address 0x4 - core index']
  #allocation1 [shape = 'u32[144,128]{1,0:T(1,128)}', space=vmem, size = 0x12000, scoped, tag = 'internal scratch']
  #allocation2 [shape = 'bf16[64,64]{1,0:T(16,128)(2,1)}', space=vmem, size = 0x4000, scoped, tag = 'scratch operand']
  %s0 = inlined_call_operand.vmem [shape: f32[2,64,64], index: 0, kind: input, shape index: {}]
  %s1 = inlined_call_operand.vmem [shape: f32[32,64], index: 1, kind: input, shape index: {}]
  %s2 = inlined_call_operand.vmem [shape: f32[64,32], index: 2, kind: input, shape index: {}]
  %s3 = inlined_call_operand.vmem [shape: f32[64,1], index: 3, kind: input, shape index: {}]
  %s4 = inlined_call_operand.vmem [shape: f32[64,1], index: 4, kind: input, shape index: {}]
  %s5 = inlined_call_operand.vmem [shape: bf16[192,64], index: 5, kind: input, shape index: {}]
  %s6 = inlined_call_operand.vmem [shape: bf16[64,64], index: 6, kind: input, shape index: {}]
  %s7 = inlined_call_operand.vmem [shape: f32[64,1], index: 7, kind: input, shape index: {}]
  %s8 = inlined_call_operand.hbm [shape: f32[2,64,64], index: 8, kind: output, shape index: {}]
  %s9 = sld [smem:[#allocation0]]
  $region65: #{tpu_custom_call.1} parent=0
    _
  %s11 = ssub.s32 1, %s9
  %s12 = scalar_select 0, %s11, %s9
  $region1: #{tpu_custom_call.1} parent=0
    #allocation3 [shape = 'u8[65536]{0}', space=vmem, size = 0x10000, scoped, tag = 'output window, operand 0']
    #allocation4 [shape = 's32[2]{0}', space=sflag, size = 0x8, scoped, tag = 'scoped memory for tpu_custom_call.1']
    %13 = vsyncpa [#allocation4], 0
    %s14 = scalar_lea.sflag [#allocation4], 1
    %15 = vsyncpa %s14, 0
    loop: start=0, step=1, limit=4
    $region2: #{tpu_custom_call.1} parent=1 // loop_pre_header
      _
    $region3: #{tpu_custom_call.1} parent=1 // loop_header
      %s17 = sphi 0, %s21
      %p18 = scmp.ge.s32.totalorder %s17, 4
      %s27 = sphi 0, %s29
      %s30 = sphi 0, %s27
      %s31 = sphi 0, %s30
      %s47 = sphi 0, %s31
      %s51 = sphi 0, %s51
      %s53 = sphi 0, %s51
      %s54 = sphi 0, %s53
      %s68 = sphi 0, %s54
      %s72 = sphi 0, %s72
      %s74 = sphi 0, %s72
      %s75 = sphi 0, %s74
      %s89 = sphi 0, %s75
      %s93 = sphi 0, %s93
      %s95 = sphi 0, %s93
      %s96 = sphi 0, %s95
      %s110 = sphi 0, %s96
      %s114 = sphi 0, %s114
      %s116 = sphi 0, %s114
      %s117 = sphi 0, %s116
      %s131 = sphi 0, %s117
      %s135 = sphi 0, %s135
      %s137 = sphi 0, %s135
      %s138 = sphi 0, %s137
      %s152 = sphi 0, %s138
      %s156 = sphi 0, %s156
      %s158 = sphi 0, %s156
      %s159 = sphi 0, %s158
      %s173 = sphi 0, %s159
      %s177 = sphi 0, %s177
      %s179 = sphi 0, %s177
      %s180 = sphi 0, %s179
      %s194 = sphi 0, %s180
      %s200 = sphi 0, %s202
      %s203 = sphi 0, %s200
      %s204 = sphi 0, %s203
      %s220 = sphi 0, %s204
    $region4: #{tpu_custom_call.1} parent=1 // loop_header_branch
      %20 = sbr.rel (%p18) target = $region8
    $region5: #{tpu_custom_call.1} parent=1 // loop_body
      %s22 = ssub.s32 %s17, 1
      %s23 = ssub.s32 %s17, 2
      %s24 = sadd.s32 %s17, 1
      %s25 = ssub.s32 %s17, %s24
      %p26 = scmp.eq.s32.totalorder %s25, 0
      %s28 = sadd.s32 %s27, 1
      %s29 = scalar_select %p26, %s27, %s28
      %p32 = pneg %p26
      %p33 = scmp.eq.s32.totalorder %s17, 1
      %p34 = por %p32, %p33
      %p35 = scmp.ne.s32.totalorder %s27, %s30
      %p36 = scmp.eq.s32.totalorder %s17, 0
      %p37 = por %p35, %p36
      %p38 = scmp.ne.s32.totalorder %s27, %s30
      %p39 = scmp.eq.s32.totalorder %s22, 1
      %p40 = por %p38, %p39
      %p41 = scmp.ne.s32.totalorder %s30, %s31
      %p42 = scmp.eq.s32.totalorder %s22, 0
      %p43 = por %p41, %p42
      %p44 = scmp.ne.s32.totalorder %s30, %s31
      %p45 = scmp.eq.s32.totalorder %s23, 1
      %p46 = por %p44, %p45
      %p48 = scmp.ne.s32.totalorder %s31, %s47
      %p49 = scmp.eq.s32.totalorder %s23, 0
      %p50 = por %p48, %p49
      %s52 = sadd.s32 %s51, 1
      %p55 = scmp.eq.s32.totalorder %s17, 1
      %p56 = scmp.ne.s32.totalorder %s51, %s53
      %p57 = scmp.eq.s32.totalorder %s17, 0
      %p58 = por %p56, %p57
      %p59 = scmp.ne.s32.totalorder %s51, %s53
      %p60 = scmp.eq.s32.totalorder %s22, 1
      %p61 = por %p59, %p60
      %p62 = scmp.ne.s32.totalorder %s53, %s54
      %p63 = scmp.eq.s32.totalorder %s22, 0
      %p64 = por %p62, %p63
      %p65 = scmp.ne.s32.totalorder %s53, %s54
      %p66 = scmp.eq.s32.totalorder %s23, 1
      %p67 = por %p65, %p66
      %p69 = scmp.ne.s32.totalorder %s54, %s68
      %p70 = scmp.eq.s32.totalorder %s23, 0
      %p71 = por %p69, %p70
      %s73 = sadd.s32 %s72, 1
      %p76 = scmp.eq.s32.totalorder %s17, 1
      %p77 = scmp.ne.s32.totalorder %s72, %s74
      %p78 = scmp.eq.s32.totalorder %s17, 0
      %p79 = por %p77, %p78
      %p80 = scmp.ne.s32.totalorder %s72, %s74
      %p81 = scmp.eq.s32.totalorder %s22, 1
      %p82 = por %p80, %p81
      %p83 = scmp.ne.s32.totalorder %s74, %s75
      %p84 = scmp.eq.s32.totalorder %s22, 0
      %p85 = por %p83, %p84
      %p86 = scmp.ne.s32.totalorder %s74, %s75
      %p87 = scmp.eq.s32.totalorder %s23, 1
      %p88 = por %p86, %p87
      %p90 = scmp.ne.s32.totalorder %s75, %s89
      %p91 = scmp.eq.s32.totalorder %s23, 0
      %p92 = por %p90, %p91
      %s94 = sadd.s32 %s93, 1
      %p97 = scmp.eq.s32.totalorder %s17, 1
      %p98 = scmp.ne.s32.totalorder %s93, %s95
      %p99 = scmp.eq.s32.totalorder %s17, 0
      %p100 = por %p98, %p99
      %p101 = scmp.ne.s32.totalorder %s93, %s95
      %p102 = scmp.eq.s32.totalorder %s22, 1
      %p103 = por %p101, %p102
      %p104 = scmp.ne.s32.totalorder %s95, %s96
      %p105 = scmp.eq.s32.totalorder %s22, 0
      %p106 = por %p104, %p105
      %p107 = scmp.ne.s32.totalorder %s95, %s96
      %p108 = scmp.eq.s32.totalorder %s23, 1
      %p109 = por %p107, %p108
      %p111 = scmp.ne.s32.totalorder %s96, %s110
      %p112 = scmp.eq.s32.totalorder %s23, 0
      %p113 = por %p111, %p112
      %s115 = sadd.s32 %s114, 1
      %p118 = scmp.eq.s32.totalorder %s17, 1
      %p119 = scmp.ne.s32.totalorder %s114, %s116
      %p120 = scmp.eq.s32.totalorder %s17, 0
      %p121 = por %p119, %p120
      %p122 = scmp.ne.s32.totalorder %s114, %s116
      %p123 = scmp.eq.s32.totalorder %s22, 1
      %p124 = por %p122, %p123
      %p125 = scmp.ne.s32.totalorder %s116, %s117
      %p126 = scmp.eq.s32.totalorder %s22, 0
      %p127 = por %p125, %p126
      %p128 = scmp.ne.s32.totalorder %s116, %s117
      %p129 = scmp.eq.s32.totalorder %s23, 1
      %p130 = por %p128, %p129
      %p132 = scmp.ne.s32.totalorder %s117, %s131
      %p133 = scmp.eq.s32.totalorder %s23, 0
      %p134 = por %p132, %p133
      %s136 = sadd.s32 %s135, 1
      %p139 = scmp.eq.s32.totalorder %s17, 1
      %p140 = scmp.ne.s32.totalorder %s135, %s137
      %p141 = scmp.eq.s32.totalorder %s17, 0
      %p142 = por %p140, %p141
      %p143 = scmp.ne.s32.totalorder %s135, %s137
      %p144 = scmp.eq.s32.totalorder %s22, 1
      %p145 = por %p143, %p144
      %p146 = scmp.ne.s32.totalorder %s137, %s138
      %p147 = scmp.eq.s32.totalorder %s22, 0
      %p148 = por %p146, %p147
      %p149 = scmp.ne.s32.totalorder %s137, %s138
      %p150 = scmp.eq.s32.totalorder %s23, 1
      %p151 = por %p149, %p150
      %p153 = scmp.ne.s32.totalorder %s138, %s152
      %p154 = scmp.eq.s32.totalorder %s23, 0
      %p155 = por %p153, %p154
      %s157 = sadd.s32 %s156, 1
      %p160 = scmp.eq.s32.totalorder %s17, 1
      %p161 = scmp.ne.s32.totalorder %s156, %s158
      %p162 = scmp.eq.s32.totalorder %s17, 0
      %p163 = por %p161, %p162
      %p164 = scmp.ne.s32.totalorder %s156, %s158
      %p165 = scmp.eq.s32.totalorder %s22, 1
      %p166 = por %p164, %p165
      %p167 = scmp.ne.s32.totalorder %s158, %s159
      %p168 = scmp.eq.s32.totalorder %s22, 0
      %p169 = por %p167, %p168
      %p170 = scmp.ne.s32.totalorder %s158, %s159
      %p171 = scmp.eq.s32.totalorder %s23, 1
      %p172 = por %p170, %p171
      %p174 = scmp.ne.s32.totalorder %s159, %s173
      %p175 = scmp.eq.s32.totalorder %s23, 0
      %p176 = por %p174, %p175
      %s178 = sadd.s32 %s177, 1
      %p181 = scmp.eq.s32.totalorder %s17, 1
      %p182 = scmp.ne.s32.totalorder %s177, %s179
      %p183 = scmp.eq.s32.totalorder %s17, 0
      %p184 = por %p182, %p183
      %p185 = scmp.ne.s32.totalorder %s177, %s179
      %p186 = scmp.eq.s32.totalorder %s22, 1
      %p187 = por %p185, %p186
      %p188 = scmp.ne.s32.totalorder %s179, %s180
      %p189 = scmp.eq.s32.totalorder %s22, 0
      %p190 = por %p188, %p189
      %p191 = scmp.ne.s32.totalorder %s179, %s180
      %p192 = scmp.eq.s32.totalorder %s23, 1
      %p193 = por %p191, %p192
      %p195 = scmp.ne.s32.totalorder %s180, %s194
      %p196 = scmp.eq.s32.totalorder %s23, 0
      %p197 = por %p195, %p196
      %s198 = ssub.s32 %s17, %s24
      %p199 = scmp.eq.s32.totalorder %s198, 0
      %s201 = sadd.s32 %s200, 1
      %s202 = scalar_select %p199, %s200, %s201
      %p205 = pneg %p199
      %p206 = scmp.eq.s32.totalorder %s17, 1
      %p207 = por %p205, %p206
      %p208 = scmp.ne.s32.totalorder %s200, %s203
      %p209 = scmp.eq.s32.totalorder %s17, 0
      %p210 = por %p208, %p209
      %p211 = scmp.ne.s32.totalorder %s200, %s203
      %p212 = scmp.eq.s32.totalorder %s22, 1
      %p213 = por %p211, %p212
      %p214 = scmp.ne.s32.totalorder %s203, %s204
      %p215 = scmp.eq.s32.totalorder %s22, 0
      %p216 = por %p214, %p215
      %p217 = scmp.ne.s32.totalorder %s203, %s204
      %p218 = scmp.eq.s32.totalorder %s23, 1
      %p219 = por %p217, %p218
      %p221 = scmp.ne.s32.totalorder %s204, %s220
      %p222 = scmp.eq.s32.totalorder %s23, 0
      %p223 = por %p221, %p222
      %p224 = scmp.le.s32.totalorder 1, %s17
      %p225 = scmp.lt.s32.totalorder %s17, 3
      %p226 = pnand %p224, %p225
      %p227 = pneg %p226
      // Predicated region
      $region9: #{tpu_custom_call.1} parent=5 // pred_check
        _
      $region10: #{tpu_custom_call.1} parent=5 // pred_check_branch
        %229 = sbr.rel (%p226) target = $region12
      $region11: #{tpu_custom_call.1} parent=5 // pred_region
        %s230 = ssub.s32 %s17, 1
        // Predicated region
        $region13: #{tpu_custom_call.1} parent=11 // pred_check
          %p231 = pneg %p64
        $region14: #{tpu_custom_call.1} parent=11 // pred_check_branch
          %233 = sbr.rel (%p231) target = $region16
        $region15: #{tpu_custom_call.1} parent=11 // pred_region
          _
        $region16: #{tpu_custom_call.1} parent=11 // pred_fallthru
          _
        // Predicated region
        $region17: #{tpu_custom_call.1} parent=11 // pred_check
          %p234 = pneg %p85
        $region18: #{tpu_custom_call.1} parent=11 // pred_check_branch
          %236 = sbr.rel (%p234) target = $region20
        $region19: #{tpu_custom_call.1} parent=11 // pred_region
          _
        $region20: #{tpu_custom_call.1} parent=11 // pred_fallthru
          _
        // Predicated region
        $region21: #{tpu_custom_call.1} parent=11 // pred_check
          %p237 = pneg %p106
        $region22: #{tpu_custom_call.1} parent=11 // pred_check_branch
          %239 = sbr.rel (%p237) target = $region24
        $region23: #{tpu_custom_call.1} parent=11 // pred_region
          _
        $region24: #{tpu_custom_call.1} parent=11 // pred_fallthru
          _
        // Predicated region
        $region25: #{tpu_custom_call.1} parent=11 // pred_check
          %p240 = pneg %p127
        $region26: #{tpu_custom_call.1} parent=11 // pred_check_branch
          %242 = sbr.rel (%p240) target = $region28
        $region27: #{tpu_custom_call.1} parent=11 // pred_region
          _
        $region28: #{tpu_custom_call.1} parent=11 // pred_fallthru
          _
        // Predicated region
        $region29: #{tpu_custom_call.1} parent=11 // pred_check
          %p243 = pneg %p148
        $region30: #{tpu_custom_call.1} parent=11 // pred_check_branch
          %245 = sbr.rel (%p243) target = $region32
        $region31: #{tpu_custom_call.1} parent=11 // pred_region
          _
        $region32: #{tpu_custom_call.1} parent=11 // pred_fallthru
          _
        // Predicated region
        $region33: #{tpu_custom_call.1} parent=11 // pred_check
          %p246 = pneg %p169
        $region34: #{tpu_custom_call.1} parent=11 // pred_check_branch
          %248 = sbr.rel (%p246) target = $region36
        $region35: #{tpu_custom_call.1} parent=11 // pred_region
          _
        $region36: #{tpu_custom_call.1} parent=11 // pred_fallthru
          _
        // Predicated region
        $region37: #{tpu_custom_call.1} parent=11 // pred_check
          %p249 = pneg %p190
        $region38: #{tpu_custom_call.1} parent=11 // pred_check_branch
          %251 = sbr.rel (%p249) target = $region40
        $region39: #{tpu_custom_call.1} parent=11 // pred_region
          _
        $region40: #{tpu_custom_call.1} parent=11 // pred_fallthru
          _
      $region12: #{tpu_custom_call.1} parent=5 // pred_fallthru
        _
      %p252 = scmp.lt.s32.totalorder %s17, 2
      // Predicated region
      $region41: #{tpu_custom_call.1} parent=5 // pred_check
        %p253 = pneg %p252
      $region42: #{tpu_custom_call.1} parent=5 // pred_check_branch
        %255 = sbr.rel (%p253) target = $region44
      $region43: #{tpu_custom_call.1} parent=5 // pred_region
        // Predicated region
        $region45: #{tpu_custom_call.1} parent=43 // pred_check
          %p256 = pneg %p37
        $region46: #{tpu_custom_call.1} parent=43 // pred_check_branch
          %258 = sbr.rel (%p256) target = $region48
        $region47: #{tpu_custom_call.1} parent=43 // pred_region
          %p259 = scmp.lt.s32.totalorder %s17, 1
          %s260 = scalar_select %p259, %s17, 1
          %s261 = smul.addr %s260, 8
          %s262 = smul.addr %s261, 8
          %s263 = scalar_lea.vmem %s0, %s262
        $region48: #{tpu_custom_call.1} parent=43 // pred_fallthru
          _
      $region44: #{tpu_custom_call.1} parent=5 // pred_fallthru
        _
      %p264 = scmp.le.s32.totalorder 1, %s17
      %p265 = scmp.lt.s32.totalorder %s17, 3
      %p266 = pnand %p264, %p265
      %p267 = pneg %p266
      // Predicated region
      $region49: #{tpu_custom_call.1} parent=5 // pred_check
        _
      $region50: #{tpu_custom_call.1} parent=5 // pred_check_branch
        %269 = sbr.rel (%p266) target = $region52
      $region51: #{tpu_custom_call.1} parent=5 // pred_region
        %s270 = ssub.s32 %s17, 1
        %p271 = scmp.lt.s32.totalorder %s22, 1
        %s272 = scalar_select %p271, %s22, 1
        %s273 = smul.addr %s272, 8
        %s274 = smul.addr %s273, 8
        %s275 = scalar_lea.vmem %s0, %s274
        %p276 = pneg %p43
        %p277 = pneg %p40
        %p278 = pneg %p64
        %p279 = pneg %p61
        %p280 = pneg %p85
        %p281 = pneg %p82
        %p282 = pneg %p106
        %p283 = pneg %p103
        %p284 = pneg %p127
        %p285 = pneg %p124
        %p286 = pneg %p148
        %p287 = pneg %p145
        %p288 = pneg %p169
        %p289 = pneg %p166
        %p290 = pneg %p190
        %p291 = pneg %p187
        %p292 = pneg %p216
        %p293 = pneg %p213
        %s294 = sand.u32 %s203, 1
        %s295 = scalar_lea.sflag [#allocation4], %s294
        %s296 = sand.u32 %s203, 1
        %s297 = smul.addr %s296, 64
        %s298 = scalar_lea.vmem [#allocation3], %s297
        %p299 = scmp.lt.s32.totalorder %s22, 1
        %s300 = scalar_select %p299, %s22, 1
        %s301 = smul.addr %s300, 8
        %s302 = smul.addr %s301, 8
        %s303 = scalar_lea.vmem %s0, %s302
        %v305 = vld [vmem:[%s303] sm:$0xff]
        %v306 = vld [vmem:[%s303 + $0x8] sm:$0xff]
        %v307 = vld [vmem:[%s303 + $0x10] sm:$0xff]
        %v308 = vld [vmem:[%s303 + $0x18] sm:$0xff]
        %v309 = vld [vmem:[%s303 + $0x20] sm:$0xff]
        %v310 = vld [vmem:[%s303 + $0x28] sm:$0xff]
        %v311 = vld [vmem:[%s303 + $0x30] sm:$0xff]
        %v312 = vld [vmem:[%s303 + $0x38] sm:$0xff]
        %vm313 = vcmask 523264
        %v314 = vsel %vm313, %v305, 0.0
        %315 = vadd.xlane.f32.xlu0 %v314
        %v316 = vpop.xlane.xlu0 %315
        %v317 = vsel %vm313, %v306, 0.0
        %318 = vadd.xlane.f32.xlu0 %v317
        %v319 = vpop.xlane.xlu0 %318
        %v320 = vsel %vm313, %v307, 0.0
        %321 = vadd.xlane.f32.xlu0 %v320
        %v322 = vpop.xlane.xlu0 %321
        %v323 = vsel %vm313, %v308, 0.0
        %324 = vadd.xlane.f32.xlu0 %v323
        %v325 = vpop.xlane.xlu0 %324
        %v326 = vsel %vm313, %v309, 0.0
        %327 = vadd.xlane.f32.xlu0 %v326
        %v328 = vpop.xlane.xlu0 %327
        %v329 = vsel %vm313, %v310, 0.0
        %330 = vadd.xlane.f32.xlu0 %v329
        %v331 = vpop.xlane.xlu0 %330
        %v332 = vsel %vm313, %v311, 0.0
        %333 = vadd.xlane.f32.xlu0 %v332
        %v334 = vpop.xlane.xlu0 %333
        %v335 = vsel %vm313, %v312, 0.0
        %336 = vadd.xlane.f32.xlu0 %v335
        %v337 = vpop.xlane.xlu0 %336
        %v338 = vmul.f32 %v305, %v305
        %v339 = vmul.f32 %v306, %v306
        %v340 = vmul.f32 %v307, %v307
        %v341 = vmul.f32 %v308, %v308
        %v342 = vmul.f32 %v309, %v309
        %v343 = vmul.f32 %v310, %v310
        %v344 = vmul.f32 %v311, %v311
        %v345 = vmul.f32 %v312, %v312
        %v346 = vsel %vm313, %v338, 0.0
        %347 = vadd.xlane.f32.xlu0 %v346
        %v348 = vpop.xlane.xlu0 %347
        %v349 = vsel %vm313, %v339, 0.0
        %350 = vadd.xlane.f32.xlu0 %v349
        %v351 = vpop.xlane.xlu0 %350
        %v352 = vsel %vm313, %v340, 0.0
        %353 = vadd.xlane.f32.xlu0 %v352
        %v354 = vpop.xlane.xlu0 %353
        %v355 = vsel %vm313, %v341, 0.0
        %356 = vadd.xlane.f32.xlu0 %v355
        %v357 = vpop.xlane.xlu0 %356
        %v358 = vsel %vm313, %v342, 0.0
        %359 = vadd.xlane.f32.xlu0 %v358
        %v360 = vpop.xlane.xlu0 %359
        %v361 = vsel %vm313, %v343, 0.0
        %362 = vadd.xlane.f32.xlu0 %v361
        %v363 = vpop.xlane.xlu0 %362
        %v364 = vsel %vm313, %v344, 0.0
        %365 = vadd.xlane.f32.xlu0 %v364
        %v366 = vpop.xlane.xlu0 %365
        %v367 = vsel %vm313, %v345, 0.0
        %368 = vadd.xlane.f32.xlu0 %v367
        %v369 = vpop.xlane.xlu0 %368
        %v370 = vld [vmem:[%s1] sm:$0xff]
        %v371 = vld [vmem:[%s1 + $0x8] sm:$0xff]
        %v372 = vld [vmem:[%s1 + $0x10] sm:$0xff]
        %v373 = vld [vmem:[%s1 + $0x18] sm:$0xff]
        %v375 = vsel %vm313, %v370, 0
        %v378 = vsel %vm313, %v371, 0
        %v381 = vsel %vm313, %v372, 0
        %v384 = vsel %vm313, %v373, 0
        %386 = vmatprep.subr.mxu0 0.0
        %387 = vmatpush1.msra.mxu0 %v316
        %388 = vmatprep.subr.mxu0 0.0
        %389 = vmatpush1.msra.mxu0 %v319
        %390 = vmatprep.subr.mxu0 0.0
        %391 = vmatpush1.msra.mxu0 %v322
        %392 = vmatprep.subr.mxu0 0.0
        %393 = vmatpush1.msra.mxu0 %v325
        %394 = vmatprep.subr.mxu0 0.0
        %395 = vmatpush1.msra.mxu0 %v328
        %396 = vmatprep.subr.mxu0 0.0
        %397 = vmatpush1.msra.mxu0 %v331
        %398 = vmatprep.subr.mxu0 0.0
        %399 = vmatpush1.msra.mxu0 %v334
        %400 = vmatprep.subr.mxu0 0.0
        %401 = vmatpush1.msra.mxu0 %v337
        %402 = vmatprep.subr.mxu0 0.0
        %403 = vmatpush1.msra.mxu0 0.0
        %404 = vmatprep.subr.mxu0 0.0
        %405 = vmatpush1.msra.mxu0 0.0
        %406 = vmatprep.subr.mxu0 0.0
        %407 = vmatpush1.msra.mxu0 0.0
        %408 = vmatprep.subr.mxu0 0.0
        %409 = vmatpush1.msra.mxu0 0.0
        %410 = vmatprep.subr.mxu0 0.0
        %411 = vmatpush1.msra.mxu0 0.0
        %412 = vmatprep.subr.mxu0 0.0
        %413 = vmatpush1.msra.mxu0 0.0
        %414 = vmatprep.subr.mxu0 0.0
        %415 = vmatpush1.msra.mxu0 0.0
        %416 = vmatprep.subr.mxu0 0.0
        %417 = vmatpush1.msra.mxu0 0.0
        %418 = vmatprep.subr.mxu0 0.0
        %419 = vmatpush1.msra.mxu0 0.0
        %420 = vmatprep.subr.mxu0 0.0
        %421 = vmatpush1.msra.mxu0 0.0
        %422 = vmatprep.subr.mxu0 0.0
        %423 = vmatpush1.msra.mxu0 0.0
        %424 = vmatprep.subr.mxu0 0.0
        %425 = vmatpush1.msra.mxu0 0.0
        %426 = vmatprep.subr.mxu0 0.0
        %427 = vmatpush1.msra.mxu0 0.0
        %428 = vmatprep.subr.mxu0 0.0
        %429 = vmatpush1.msra.mxu0 0.0
        %430 = vmatprep.subr.mxu0 0.0
        %431 = vmatpush1.msra.mxu0 0.0
        %432 = vmatprep.subr.mxu0 0.0
        %433 = vmatpush1.msra.mxu0 0.0
        %434 = vmatprep.subr.mxu0 0.0
        %435 = vmatpush1.msra.mxu0 0.0
        %436 = vmatprep.subr.mxu0 0.0
        %437 = vmatpush1.msra.mxu0 0.0
        %438 = vmatprep.subr.mxu0 0.0
        %439 = vmatpush1.msra.mxu0 0.0
        %440 = vmatprep.subr.mxu0 0.0
        %441 = vmatpush1.msra.mxu0 0.0
        %442 = vmatprep.subr.mxu0 0.0
        %443 = vmatpush1.msra.mxu0 0.0
        %444 = vmatprep.subr.mxu0 0.0
        %445 = vmatpush1.msra.mxu0 0.0
        %446 = vmatprep.subr.mxu0 0.0
        %447 = vmatpush1.msra.mxu0 0.0
        %448 = vmatprep.subr.mxu0 0.0
        %449 = vmatpush1.msra.mxu0 0.0
        %450 = vmatprep.mubr.f32.mxu0 0.0
        %451 = vmatmul.mubr.f32.gmra.mrb[0].mxu0 %v375
        %v452 = vpop.f32.mrb[0].mxu0
        %v453 = vadd.f32 0.0, %v452
        %v454 = vpop.f32.mrb[0].mxu0
        %455 = vmatprep.mubr.f32.mxu0 0.0
        %456 = vmatmul.mubr.f32.gmra.mrb[0].mxu0 %v378
        %v457 = vpop.f32.mrb[0].mxu0
        %v458 = vadd.f32 0.0, %v457
        %v459 = vpop.f32.mrb[0].mxu0
        %460 = vmatprep.mubr.f32.mxu0 0.0
        %461 = vmatmul.mubr.f32.gmra.mrb[0].mxu0 %v381
        %v462 = vpop.f32.mrb[0].mxu0
        %v463 = vadd.f32 0.0, %v462
        %v464 = vpop.f32.mrb[0].mxu0
        %465 = vmatprep.mubr.f32.mxu0 0.0
        %466 = vmatmul.mubr.f32.gmra.mrb[0].mxu0 %v384
        %v467 = vpop.f32.mrb[0].mxu0
        %v468 = vadd.f32 0.0, %v467
        %v469 = vpop.f32.mrb[0].mxu0
        %470 = vdwg.mxu0
        %v471 = vmul.f32 %v453, 0.0078125
        %v472 = vmul.f32 %v458, 0.0078125
        %v473 = vmul.f32 %v463, 0.0078125
        %v474 = vmul.f32 %v468, 0.0078125
        %475 = vmatprep.subr.mxu0 0.0
        %476 = vmatpush1.msra.mxu0 %v348
        %477 = vmatprep.subr.mxu0 0.0
        %478 = vmatpush1.msra.mxu0 %v351
        %479 = vmatprep.subr.mxu0 0.0
        %480 = vmatpush1.msra.mxu0 %v354
        %481 = vmatprep.subr.mxu0 0.0
        %482 = vmatpush1.msra.mxu0 %v357
        %483 = vmatprep.subr.mxu0 0.0
        %484 = vmatpush1.msra.mxu0 %v360
        %485 = vmatprep.subr.mxu0 0.0
        %486 = vmatpush1.msra.mxu0 %v363
        %487 = vmatprep.subr.mxu0 0.0
        %488 = vmatpush1.msra.mxu0 %v366
        %489 = vmatprep.subr.mxu0 0.0
        %490 = vmatpush1.msra.mxu0 %v369
        %491 = vmatprep.subr.mxu0 0.0
        %492 = vmatpush1.msra.mxu0 0.0
        %493 = vmatprep.subr.mxu0 0.0
        %494 = vmatpush1.msra.mxu0 0.0
        %495 = vmatprep.subr.mxu0 0.0
        %496 = vmatpush1.msra.mxu0 0.0
        %497 = vmatprep.subr.mxu0 0.0
        %498 = vmatpush1.msra.mxu0 0.0
        %499 = vmatprep.subr.mxu0 0.0
        %500 = vmatpush1.msra.mxu0 0.0
        %501 = vmatprep.subr.mxu0 0.0
        %502 = vmatpush1.msra.mxu0 0.0
        %503 = vmatprep.subr.mxu0 0.0
        %504 = vmatpush1.msra.mxu0 0.0
        %505 = vmatprep.subr.mxu0 0.0
        %506 = vmatpush1.msra.mxu0 0.0
        %507 = vmatprep.subr.mxu0 0.0
        %508 = vmatpush1.msra.mxu0 0.0
        %509 = vmatprep.subr.mxu0 0.0
        %510 = vmatpush1.msra.mxu0 0.0
        %511 = vmatprep.subr.mxu0 0.0
        %512 = vmatpush1.msra.mxu0 0.0
        %513 = vmatprep.subr.mxu0 0.0
        %514 = vmatpush1.msra.mxu0 0.0
        %515 = vmatprep.subr.mxu0 0.0
        %516 = vmatpush1.msra.mxu0 0.0
        %517 = vmatprep.subr.mxu0 0.0
        %518 = vmatpush1.msra.mxu0 0.0
        %519 = vmatprep.subr.mxu0 0.0
        %520 = vmatpush1.msra.mxu0 0.0
        %521 = vmatprep.subr.mxu0 0.0
        %522 = vmatpush1.msra.mxu0 0.0
        %523 = vmatprep.subr.mxu0 0.0
        %524 = vmatpush1.msra.mxu0 0.0
        %525 = vmatprep.subr.mxu0 0.0
        %526 = vmatpush1.msra.mxu0 0.0
        %527 = vmatprep.subr.mxu0 0.0
        %528 = vmatpush1.msra.mxu0 0.0
        %529 = vmatprep.subr.mxu0 0.0
        %530 = vmatpush1.msra.mxu0 0.0
        %531 = vmatprep.subr.mxu0 0.0
        %532 = vmatpush1.msra.mxu0 0.0
        %533 = vmatprep.subr.mxu0 0.0
        %534 = vmatpush1.msra.mxu0 0.0
        %535 = vmatprep.subr.mxu0 0.0
        %536 = vmatpush1.msra.mxu0 0.0
        %537 = vmatprep.subr.mxu0 0.0
        %538 = vmatpush1.msra.mxu0 0.0
        %539 = vmatprep.mubr.f32.mxu0 0.0
        %540 = vmatmul.mubr.f32.gmra.mrb[0].mxu0 %v375
        %v541 = vpop.f32.mrb[0].mxu0
        %v542 = vadd.f32 0.0, %v541
        %v543 = vpop.f32.mrb[0].mxu0
        %544 = vmatprep.mubr.f32.mxu0 0.0
        %545 = vmatmul.mubr.f32.gmra.mrb[0].mxu0 %v378
        %v546 = vpop.f32.mrb[0].mxu0
        %v547 = vadd.f32 0.0, %v546
        %v548 = vpop.f32.mrb[0].mxu0
        %549 = vmatprep.mubr.f32.mxu0 0.0
        %550 = vmatmul.mubr.f32.gmra.mrb[0].mxu0 %v381
        %v551 = vpop.f32.mrb[0].mxu0
        %v552 = vadd.f32 0.0, %v551
        %v553 = vpop.f32.mrb[0].mxu0
        %554 = vmatprep.mubr.f32.mxu0 0.0
        %555 = vmatmul.mubr.f32.gmra.mrb[0].mxu0 %v384
        %v556 = vpop.f32.mrb[0].mxu0
        %v557 = vadd.f32 0.0, %v556
        %v558 = vpop.f32.mrb[0].mxu0
        %559 = vdwg.mxu0
        %v560 = vmul.f32 %v542, 0.0078125
        %v561 = vmul.f32 %v547, 0.0078125
        %v562 = vmul.f32 %v552, 0.0078125
        %v563 = vmul.f32 %v557, 0.0078125
        %v564 = vmul.f32 %v471, %v471
        %v565 = vmul.f32 %v472, %v472
        %v566 = vmul.f32 %v473, %v473
        %v567 = vmul.f32 %v474, %v474
        %v568 = vsub.f32 %v560, %v564
        %v569 = vsub.f32 %v561, %v565
        %v570 = vsub.f32 %v562, %v566
        %v571 = vsub.f32 %v563, %v567
        %v572 = vmax.f32 %v568, 0.0
        %v573 = vmax.f32 %v569, 0.0
        %v574 = vmax.f32 %v570, 0.0
        %v575 = vmax.f32 %v571, 0.0
        %v576 = vadd.f32 %v572, 1e-05
        %v577 = vadd.f32 %v573, 1e-05
        %v578 = vadd.f32 %v574, 1e-05
        %v579 = vadd.f32 %v575, 1e-05
        %v580 = vrsqrt.pop %v576
        %v581 = vrsqrt.pop %v577
        %v582 = vrsqrt.pop %v578
        %v583 = vrsqrt.pop %v579
        %v584 = vld [vmem:[%s2] sm:$0xff]
        %v585 = vld [vmem:[%s2 + $0x8] sm:$0xff]
        %v586 = vld [vmem:[%s2 + $0x10] sm:$0xff]
        %v587 = vld [vmem:[%s2 + $0x18] sm:$0xff]
        %v588 = vld [vmem:[%s2 + $0x20] sm:$0xff]
        %v589 = vld [vmem:[%s2 + $0x28] sm:$0xff]
        %v590 = vld [vmem:[%s2 + $0x30] sm:$0xff]
        %v591 = vld [vmem:[%s2 + $0x38] sm:$0xff]
        %vm592 = vcmask 261120
        %v594 = vsel %vm592, %v584, 0
        %v597 = vsel %vm592, %v585, 0
        %v600 = vsel %vm592, %v586, 0
        %v603 = vsel %vm592, %v587, 0
        %v606 = vsel %vm592, %v588, 0
        %v609 = vsel %vm592, %v589, 0
        %v612 = vsel %vm592, %v590, 0
        %v615 = vsel %vm592, %v591, 0
        %617 = vmatprep.subr.mxu0 0.0
        %618 = vmatpush1.msra.mxu0 %v471
        %619 = vmatprep.subr.mxu0 0.0
        %620 = vmatpush1.msra.mxu0 %v472
        %621 = vmatprep.subr.mxu0 0.0
        %622 = vmatpush1.msra.mxu0 %v473
        %623 = vmatprep.subr.mxu0 0.0
        %624 = vmatpush1.msra.mxu0 %v474
        %625 = vmatprep.subr.mxu0 0.0
        %626 = vmatpush1.msra.mxu0 0.0
        %627 = vmatprep.subr.mxu0 0.0
        %628 = vmatpush1.msra.mxu0 0.0
        %629 = vmatprep.subr.mxu0 0.0
        %630 = vmatpush1.msra.mxu0 0.0
        %631 = vmatprep.subr.mxu0 0.0
        %632 = vmatpush1.msra.mxu0 0.0
        %633 = vmatprep.subr.mxu0 0.0
        %634 = vmatpush1.msra.mxu0 0.0
        %635 = vmatprep.subr.mxu0 0.0
        %636 = vmatpush1.msra.mxu0 0.0
        %637 = vmatprep.subr.mxu0 0.0
        %638 = vmatpush1.msra.mxu0 0.0
        %639 = vmatprep.subr.mxu0 0.0
        %640 = vmatpush1.msra.mxu0 0.0
        %641 = vmatprep.subr.mxu0 0.0
        %642 = vmatpush1.msra.mxu0 0.0
        %643 = vmatprep.subr.mxu0 0.0
        %644 = vmatpush1.msra.mxu0 0.0
        %645 = vmatprep.subr.mxu0 0.0
        %646 = vmatpush1.msra.mxu0 0.0
        %647 = vmatprep.subr.mxu0 0.0
        %648 = vmatpush1.msra.mxu0 0.0
        %649 = vmatprep.subr.mxu0 0.0
        %650 = vmatpush1.msra.mxu0 0.0
        %651 = vmatprep.subr.mxu0 0.0
        %652 = vmatpush1.msra.mxu0 0.0
        %653 = vmatprep.subr.mxu0 0.0
        %654 = vmatpush1.msra.mxu0 0.0
        %655 = vmatprep.subr.mxu0 0.0
        %656 = vmatpush1.msra.mxu0 0.0
        %657 = vmatprep.subr.mxu0 0.0
        %658 = vmatpush1.msra.mxu0 0.0
        %659 = vmatprep.subr.mxu0 0.0
        %660 = vmatpush1.msra.mxu0 0.0
        %661 = vmatprep.subr.mxu0 0.0
        %662 = vmatpush1.msra.mxu0 0.0
        %663 = vmatprep.subr.mxu0 0.0
        %664 = vmatpush1.msra.mxu0 0.0
        %665 = vmatprep.subr.mxu0 0.0
        %666 = vmatpush1.msra.mxu0 0.0
        %667 = vmatprep.subr.mxu0 0.0
        %668 = vmatpush1.msra.mxu0 0.0
        %669 = vmatprep.subr.mxu0 0.0
        %670 = vmatpush1.msra.mxu0 0.0
        %671 = vmatprep.subr.mxu0 0.0
        %672 = vmatpush1.msra.mxu0 0.0
        %673 = vmatprep.subr.mxu0 0.0
        %674 = vmatpush1.msra.mxu0 0.0
        %675 = vmatprep.subr.mxu0 0.0
        %676 = vmatpush1.msra.mxu0 0.0
        %677 = vmatprep.subr.mxu0 0.0
        %678 = vmatpush1.msra.mxu0 0.0
        %679 = vmatprep.subr.mxu0 0.0
        %680 = vmatpush1.msra.mxu0 0.0
        %681 = vmatprep.mubr.f32.mxu0 0.0
        %682 = vmatmul.mubr.f32.gmra.mrb[0].mxu0 %v594
        %v683 = vpop.f32.mrb[0].mxu0
        %v684 = vadd.f32 0.0, %v683
        %v685 = vpop.f32.mrb[0].mxu0
        %686 = vmatprep.mubr.f32.mxu0 0.0
        %687 = vmatmul.mubr.f32.gmra.mrb[0].mxu0 %v597
        %v688 = vpop.f32.mrb[0].mxu0
        %v689 = vadd.f32 0.0, %v688
        %v690 = vpop.f32.mrb[0].mxu0
        %691 = vmatprep.mubr.f32.mxu0 0.0
        %692 = vmatmul.mubr.f32.gmra.mrb[0].mxu0 %v600
        %v693 = vpop.f32.mrb[0].mxu0
        %v694 = vadd.f32 0.0, %v693
        %v695 = vpop.f32.mrb[0].mxu0
        %696 = vmatprep.mubr.f32.mxu0 0.0
        %697 = vmatmul.mubr.f32.gmra.mrb[0].mxu0 %v603
        %v698 = vpop.f32.mrb[0].mxu0
        %v699 = vadd.f32 0.0, %v698
        %v700 = vpop.f32.mrb[0].mxu0
        %701 = vmatprep.mubr.f32.mxu0 0.0
        %702 = vmatmul.mubr.f32.gmra.mrb[0].mxu0 %v606
        %v703 = vpop.f32.mrb[0].mxu0
        %v704 = vadd.f32 0.0, %v703
        %v705 = vpop.f32.mrb[0].mxu0
        %706 = vmatprep.mubr.f32.mxu0 0.0
        %707 = vmatmul.mubr.f32.gmra.mrb[0].mxu0 %v609
        %v708 = vpop.f32.mrb[0].mxu0
        %v709 = vadd.f32 0.0, %v708
        %v710 = vpop.f32.mrb[0].mxu0
        %711 = vmatprep.mubr.f32.mxu0 0.0
        %712 = vmatmul.mubr.f32.gmra.mrb[0].mxu0 %v612
        %v713 = vpop.f32.mrb[0].mxu0
        %v714 = vadd.f32 0.0, %v713
        %v715 = vpop.f32.mrb[0].mxu0
        %716 = vmatprep.mubr.f32.mxu0 0.0
        %717 = vmatmul.mubr.f32.gmra.mrb[0].mxu0 %v615
        %v718 = vpop.f32.mrb[0].mxu0
        %v719 = vadd.f32 0.0, %v718
        %v720 = vpop.f32.mrb[0].mxu0
        %721 = vdwg.mxu0
        %722 = vmatprep.subr.mxu0 0.0
        %723 = vmatpush1.msra.mxu0 %v580
        %724 = vmatprep.subr.mxu0 0.0
        %725 = vmatpush1.msra.mxu0 %v581
        %726 = vmatprep.subr.mxu0 0.0
        %727 = vmatpush1.msra.mxu0 %v582
        %728 = vmatprep.subr.mxu0 0.0
        %729 = vmatpush1.msra.mxu0 %v583
        %730 = vmatprep.subr.mxu0 0.0
        %731 = vmatpush1.msra.mxu0 0.0
        %732 = vmatprep.subr.mxu0 0.0
        %733 = vmatpush1.msra.mxu0 0.0
        %734 = vmatprep.subr.mxu0 0.0
        %735 = vmatpush1.msra.mxu0 0.0
        %736 = vmatprep.subr.mxu0 0.0
        %737 = vmatpush1.msra.mxu0 0.0
        %738 = vmatprep.subr.mxu0 0.0
        %739 = vmatpush1.msra.mxu0 0.0
        %740 = vmatprep.subr.mxu0 0.0
        %741 = vmatpush1.msra.mxu0 0.0
        %742 = vmatprep.subr.mxu0 0.0
        %743 = vmatpush1.msra.mxu0 0.0
        %744 = vmatprep.subr.mxu0 0.0
        %745 = vmatpush1.msra.mxu0 0.0
        %746 = vmatprep.subr.mxu0 0.0
        %747 = vmatpush1.msra.mxu0 0.0
        %748 = vmatprep.subr.mxu0 0.0
        %749 = vmatpush1.msra.mxu0 0.0
        %750 = vmatprep.subr.mxu0 0.0
        %751 = vmatpush1.msra.mxu0 0.0
        %752 = vmatprep.subr.mxu0 0.0
        %753 = vmatpush1.msra.mxu0 0.0
        %754 = vmatprep.subr.mxu0 0.0
        %755 = vmatpush1.msra.mxu0 0.0
        %756 = vmatprep.subr.mxu0 0.0
        %757 = vmatpush1.msra.mxu0 0.0
        %758 = vmatprep.subr.mxu0 0.0
        %759 = vmatpush1.msra.mxu0 0.0
        %760 = vmatprep.subr.mxu0 0.0
        %761 = vmatpush1.msra.mxu0 0.0
        %762 = vmatprep.subr.mxu0 0.0
        %763 = vmatpush1.msra.mxu0 0.0
        %764 = vmatprep.subr.mxu0 0.0
        %765 = vmatpush1.msra.mxu0 0.0
        %766 = vmatprep.subr.mxu0 0.0
        %767 = vmatpush1.msra.mxu0 0.0
        %768 = vmatprep.subr.mxu0 0.0
        %769 = vmatpush1.msra.mxu0 0.0
        %770 = vmatprep.subr.mxu0 0.0
        %771 = vmatpush1.msra.mxu0 0.0
        %772 = vmatprep.subr.mxu0 0.0
        %773 = vmatpush1.msra.mxu0 0.0
        %774 = vmatprep.subr.mxu0 0.0
        %775 = vmatpush1.msra.mxu0 0.0
        %776 = vmatprep.subr.mxu0 0.0
        %777 = vmatpush1.msra.mxu0 0.0
        %778 = vmatprep.subr.mxu0 0.0
        %779 = vmatpush1.msra.mxu0 0.0
        %780 = vmatprep.subr.mxu0 0.0
        %781 = vmatpush1.msra.mxu0 0.0
        %782 = vmatprep.subr.mxu0 0.0
        %783 = vmatpush1.msra.mxu0 0.0
        %784 = vmatprep.subr.mxu0 0.0
        %785 = vmatpush1.msra.mxu0 0.0
        %786 = vmatprep.mubr.f32.mxu0 0.0
        %787 = vmatmul.mubr.f32.gmra.mrb[0].mxu0 %v594
        %v788 = vpop.f32.mrb[0].mxu0
        %v789 = vadd.f32 0.0, %v788
        %v790 = vpop.f32.mrb[0].mxu0
        %791 = vmatprep.mubr.f32.mxu0 0.0
        %792 = vmatmul.mubr.f32.gmra.mrb[0].mxu0 %v597
        %v793 = vpop.f32.mrb[0].mxu0
        %v794 = vadd.f32 0.0, %v793
        %v795 = vpop.f32.mrb[0].mxu0
        %796 = vmatprep.mubr.f32.mxu0 0.0
        %797 = vmatmul.mubr.f32.gmra.mrb[0].mxu0 %v600
        %v798 = vpop.f32.mrb[0].mxu0
        %v799 = vadd.f32 0.0, %v798
        %v800 = vpop.f32.mrb[0].mxu0
        %801 = vmatprep.mubr.f32.mxu0 0.0
        %802 = vmatmul.mubr.f32.gmra.mrb[0].mxu0 %v603
        %v803 = vpop.f32.mrb[0].mxu0
        %v804 = vadd.f32 0.0, %v803
        %v805 = vpop.f32.mrb[0].mxu0
        %806 = vmatprep.mubr.f32.mxu0 0.0
        %807 = vmatmul.mubr.f32.gmra.mrb[0].mxu0 %v606
        %v808 = vpop.f32.mrb[0].mxu0
        %v809 = vadd.f32 0.0, %v808
        %v810 = vpop.f32.mrb[0].mxu0
        %811 = vmatprep.mubr.f32.mxu0 0.0
        %812 = vmatmul.mubr.f32.gmra.mrb[0].mxu0 %v609
        %v813 = vpop.f32.mrb[0].mxu0
        %v814 = vadd.f32 0.0, %v813
        %v815 = vpop.f32.mrb[0].mxu0
        %816 = vmatprep.mubr.f32.mxu0 0.0
        %817 = vmatmul.mubr.f32.gmra.mrb[0].mxu0 %v612
        %v818 = vpop.f32.mrb[0].mxu0
        %v819 = vadd.f32 0.0, %v818
        %v820 = vpop.f32.mrb[0].mxu0
        %821 = vmatprep.mubr.f32.mxu0 0.0
        %822 = vmatmul.mubr.f32.gmra.mrb[0].mxu0 %v615
        %v823 = vpop.f32.mrb[0].mxu0
        %v824 = vadd.f32 0.0, %v823
        %v825 = vpop.f32.mrb[0].mxu0
        %826 = vdwg.mxu0
        %v827 = vld [vmem:[%s3] sm:$0xff]
        %v828 = vld [vmem:[%s3 + $0x8] sm:$0xff]
        %v829 = vld [vmem:[%s3 + $0x10] sm:$0xff]
        %v830 = vld [vmem:[%s3 + $0x18] sm:$0xff]
        %v831 = vld [vmem:[%s3 + $0x20] sm:$0xff]
        %v832 = vld [vmem:[%s3 + $0x28] sm:$0xff]
        %v833 = vld [vmem:[%s3 + $0x30] sm:$0xff]
        %v834 = vld [vmem:[%s3 + $0x38] sm:$0xff]
        %v835 = vmul.f32 %v789, %v827
        %v836 = vmul.f32 %v794, %v828
        %v837 = vmul.f32 %v799, %v829
        %v838 = vmul.f32 %v804, %v830
        %v839 = vmul.f32 %v809, %v831
        %v840 = vmul.f32 %v814, %v832
        %v841 = vmul.f32 %v819, %v833
        %v842 = vmul.f32 %v824, %v834
        %v843 = vld [vmem:[%s4] sm:$0xff]
        %v844 = vld [vmem:[%s4 + $0x8] sm:$0xff]
        %v845 = vld [vmem:[%s4 + $0x10] sm:$0xff]
        %v846 = vld [vmem:[%s4 + $0x18] sm:$0xff]
        %v847 = vld [vmem:[%s4 + $0x20] sm:$0xff]
        %v848 = vld [vmem:[%s4 + $0x28] sm:$0xff]
        %v849 = vld [vmem:[%s4 + $0x30] sm:$0xff]
        %v850 = vld [vmem:[%s4 + $0x38] sm:$0xff]
        %v851 = vmul.f32 %v684, %v835
        %v852 = vmul.f32 %v689, %v836
        %v853 = vmul.f32 %v694, %v837
        %v854 = vmul.f32 %v699, %v838
        %v855 = vmul.f32 %v704, %v839
        %v856 = vmul.f32 %v709, %v840
        %v857 = vmul.f32 %v714, %v841
        %v858 = vmul.f32 %v719, %v842
        %v859 = vsub.f32 %v843, %v851
        %v860 = vsub.f32 %v844, %v852
        %v861 = vsub.f32 %v845, %v853
        %v862 = vsub.f32 %v846, %v854
        %v863 = vsub.f32 %v847, %v855
        %v864 = vsub.f32 %v848, %v856
        %v865 = vsub.f32 %v849, %v857
        %v866 = vsub.f32 %v850, %v858
        %868 = vset.pattern.permute.xlu0 0
        %869 = vperm.xlu0 %868, %v835
        %v870 = vpop.permute.xlu0 %869
        %873 = vset.pattern.permute.xlu0 0
        %874 = vperm.xlu0 %873, %v836
        %v875 = vpop.permute.xlu0 %874
        %878 = vset.pattern.permute.xlu0 0
        %879 = vperm.xlu0 %878, %v837
        %v880 = vpop.permute.xlu0 %879
        %883 = vset.pattern.permute.xlu0 0
        %884 = vperm.xlu0 %883, %v838
        %v885 = vpop.permute.xlu0 %884
        %888 = vset.pattern.permute.xlu0 0
        %889 = vperm.xlu0 %888, %v839
        %v890 = vpop.permute.xlu0 %889
        %893 = vset.pattern.permute.xlu0 0
        %894 = vperm.xlu0 %893, %v840
        %v895 = vpop.permute.xlu0 %894
        %898 = vset.pattern.permute.xlu0 0
        %899 = vperm.xlu0 %898, %v841
        %v900 = vpop.permute.xlu0 %899
        %903 = vset.pattern.permute.xlu0 0
        %904 = vperm.xlu0 %903, %v842
        %v905 = vpop.permute.xlu0 %904
        %v907 = vmul.f32 %v305, %v870
        %v908 = vmul.f32 %v306, %v875
        %v909 = vmul.f32 %v307, %v880
        %v910 = vmul.f32 %v308, %v885
        %v911 = vmul.f32 %v309, %v890
        %v912 = vmul.f32 %v310, %v895
        %v913 = vmul.f32 %v311, %v900
        %v914 = vmul.f32 %v312, %v905
        %916 = vset.pattern.permute.xlu0 0
        %917 = vperm.xlu0 %916, %v859
        %v918 = vpop.permute.xlu0 %917
        %921 = vset.pattern.permute.xlu0 0
        %922 = vperm.xlu0 %921, %v860
        %v923 = vpop.permute.xlu0 %922
        %926 = vset.pattern.permute.xlu0 0
        %927 = vperm.xlu0 %926, %v861
        %v928 = vpop.permute.xlu0 %927
        %931 = vset.pattern.permute.xlu0 0
        %932 = vperm.xlu0 %931, %v862
        %v933 = vpop.permute.xlu0 %932
        %936 = vset.pattern.permute.xlu0 0
        %937 = vperm.xlu0 %936, %v863
        %v938 = vpop.permute.xlu0 %937
        %941 = vset.pattern.permute.xlu0 0
        %942 = vperm.xlu0 %941, %v864
        %v943 = vpop.permute.xlu0 %942
        %946 = vset.pattern.permute.xlu0 0
        %947 = vperm.xlu0 %946, %v865
        %v948 = vpop.permute.xlu0 %947
        %951 = vset.pattern.permute.xlu0 0
        %952 = vperm.xlu0 %951, %v866
        %v953 = vpop.permute.xlu0 %952
        %v955 = vadd.f32 %v907, %v918
        %v956 = vadd.f32 %v908, %v923
        %v957 = vadd.f32 %v909, %v928
        %v958 = vadd.f32 %v910, %v933
        %v959 = vadd.f32 %v911, %v938
        %v960 = vadd.f32 %v912, %v943
        %v961 = vadd.f32 %v913, %v948
        %v962 = vadd.f32 %v914, %v953
        %v963 = vpack.c.bf16 %v956, %v955
        %v964 = vpack.c.bf16 %v958, %v957
        %v965 = vpack.c.bf16 %v960, %v959
        %v966 = vpack.c.bf16 %v962, %v961
        %v967 = vld [vmem:[%s5] sm:$0xf]
        %v968 = vld [vmem:[%s5 + $0x4] sm:$0xf]
        %v969 = vld [vmem:[%s5 + $0x8] sm:$0xf]
        %v970 = vld [vmem:[%s5 + $0xc] sm:$0xf]
        %v971 = vld [vmem:[%s5 + $0x10] sm:$0xf]
        %v972 = vld [vmem:[%s5 + $0x14] sm:$0xf]
        %v973 = vld [vmem:[%s5 + $0x18] sm:$0xf]
        %v974 = vld [vmem:[%s5 + $0x1c] sm:$0xf]
        %v975 = vld [vmem:[%s5 + $0x20] sm:$0xf]
        %v976 = vld [vmem:[%s5 + $0x24] sm:$0xf]
        %v977 = vld [vmem:[%s5 + $0x28] sm:$0xf]
        %v978 = vld [vmem:[%s5 + $0x2c] sm:$0xf]
        %v979 = vld [vmem:[%s5 + $0x30] sm:$0xf]
        %v980 = vld [vmem:[%s5 + $0x34] sm:$0xf]
        %v981 = vld [vmem:[%s5 + $0x38] sm:$0xf]
        %v982 = vld [vmem:[%s5 + $0x3c] sm:$0xf]
        %v983 = vld [vmem:[%s5 + $0x40] sm:$0xf]
        %v984 = vld [vmem:[%s5 + $0x44] sm:$0xf]
        %v985 = vld [vmem:[%s5 + $0x48] sm:$0xf]
        %v986 = vld [vmem:[%s5 + $0x4c] sm:$0xf]
        %v987 = vld [vmem:[%s5 + $0x50] sm:$0xf]
        %v988 = vld [vmem:[%s5 + $0x54] sm:$0xf]
        %v989 = vld [vmem:[%s5 + $0x58] sm:$0xf]
        %v990 = vld [vmem:[%s5 + $0x5c] sm:$0xf]
        %v1015 = vunpack.c.l.b16 %v967
        %v1016 = vunpack.c.l.b16 %v968
        %v1017 = vunpack.c.l.b16 %v969
        %v1018 = vunpack.c.l.b16 %v970
        %v1019 = vunpack.c.l.b16 %v971
        %v1020 = vunpack.c.l.b16 %v972
        %v1021 = vunpack.c.l.b16 %v973
        %v1022 = vunpack.c.l.b16 %v974
        %v1023 = vunpack.c.l.b16 %v975
        %v1024 = vunpack.c.l.b16 %v976
        %v1025 = vunpack.c.l.b16 %v977
        %v1026 = vunpack.c.l.b16 %v978
        %v1027 = vunpack.c.l.b16 %v979
        %v1028 = vunpack.c.l.b16 %v980
        %v1029 = vunpack.c.l.b16 %v981
        %v1030 = vunpack.c.l.b16 %v982
        %v1031 = vunpack.c.l.b16 %v983
        %v1032 = vunpack.c.l.b16 %v984
        %v1033 = vunpack.c.l.b16 %v985
        %v1034 = vunpack.c.l.b16 %v986
        %v1035 = vunpack.c.l.b16 %v987
        %v1036 = vunpack.c.l.b16 %v988
        %v1037 = vunpack.c.l.b16 %v989
        %v1038 = vunpack.c.l.b16 %v990
        %v1039 = vpack.c.b16 %v1016, %v1015
        %v1040 = vpack.c.b16 %v1018, %v1017
        %v1041 = vpack.c.b16 %v1020, %v1019
        %v1042 = vpack.c.b16 %v1022, %v1021
        %v1043 = vpack.c.b16 %v1024, %v1023
        %v1044 = vpack.c.b16 %v1026, %v1025
        %v1045 = vpack.c.b16 %v1028, %v1027
        %v1046 = vpack.c.b16 %v1030, %v1029
        %v1047 = vpack.c.b16 %v1032, %v1031
        %v1048 = vpack.c.b16 %v1034, %v1033
        %v1049 = vpack.c.b16 %v1036, %v1035
        %v1050 = vpack.c.b16 %v1038, %v1037
        %v1052 = vsel %vm313, %v1039, 0
        %v1055 = vsel %vm313, %v1040, 0
        %v1058 = vsel %vm313, %v1041, 0
        %v1061 = vsel %vm313, %v1042, 0
        %v1064 = vsel %vm313, %v1043, 0
        %v1067 = vsel %vm313, %v1044, 0
        %v1070 = vsel %vm313, %v1045, 0
        %v1073 = vsel %vm313, %v1046, 0
        %v1076 = vsel %vm313, %v1047, 0
        %v1079 = vsel %vm313, %v1048, 0
        %v1082 = vsel %vm313, %v1049, 0
        %v1085 = vsel %vm313, %v1050, 0
        %1087 = vmatprep.subr.bf16.mxu0 0
        %1088 = vmatpush1.bf16.msra.mxu0 %v963
        %1089 = vmatprep.subr.bf16.mxu0 0
        %1090 = vmatpush1.bf16.msra.mxu0 %v964
        %1091 = vmatprep.subr.bf16.mxu0 0
        %1092 = vmatpush1.bf16.msra.mxu0 %v965
        %1093 = vmatprep.subr.bf16.mxu0 0
        %1094 = vmatpush1.bf16.msra.mxu0 %v966
        %1095 = vmatprep.subr.bf16.mxu0 0
        %1096 = vmatpush1.bf16.msra.mxu0 0
        %1097 = vmatprep.subr.bf16.mxu0 0
        %1098 = vmatpush1.bf16.msra.mxu0 0
        %1099 = vmatprep.subr.bf16.mxu0 0
        %1100 = vmatpush1.bf16.msra.mxu0 0
        %1101 = vmatprep.subr.bf16.mxu0 0
        %1102 = vmatpush1.bf16.msra.mxu0 0
        %1103 = vmatprep.subr.bf16.mxu0 0
        %1104 = vmatpush1.bf16.msra.mxu0 0
        %1105 = vmatprep.subr.bf16.mxu0 0
        %1106 = vmatpush1.bf16.msra.mxu0 0
        %1107 = vmatprep.subr.bf16.mxu0 0
        %1108 = vmatpush1.bf16.msra.mxu0 0
        %1109 = vmatprep.subr.bf16.mxu0 0
        %1110 = vmatpush1.bf16.msra.mxu0 0
        %1111 = vmatprep.subr.bf16.mxu0 0
        %1112 = vmatpush1.bf16.msra.mxu0 0
        %1113 = vmatprep.subr.bf16.mxu0 0
        %1114 = vmatpush1.bf16.msra.mxu0 0
        %1115 = vmatprep.subr.bf16.mxu0 0
        %1116 = vmatpush1.bf16.msra.mxu0 0
        %1117 = vmatprep.subr.bf16.mxu0 0
        %1118 = vmatpush1.bf16.msra.mxu0 0
        %1119 = vmatprep.mubr.bf16.mxu0 0
        %1120 = vmatmul.mubr.bf16.gmra.mrb[0].mxu0 %v1052
        %v1121 = vpop.f32.mrb[0].mxu0
        %v1122 = vadd.f32 0.0, %v1121
        %v1123 = vpop.f32.mrb[0].mxu0
        %v1124 = vpop.f32.mrb[0].mxu0
        %v1125 = vadd.f32 0.0, %v1124
        %v1126 = vpop.f32.mrb[0].mxu0
        %1127 = vmatprep.mubr.bf16.mxu0 0
        %1128 = vmatmul.mubr.bf16.gmra.mrb[0].mxu0 %v1055
        %v1129 = vpop.f32.mrb[0].mxu0
        %v1130 = vadd.f32 0.0, %v1129
        %v1131 = vpop.f32.mrb[0].mxu0
        %v1132 = vpop.f32.mrb[0].mxu0
        %v1133 = vadd.f32 0.0, %v1132
        %v1134 = vpop.f32.mrb[0].mxu0
        %1135 = vmatprep.mubr.bf16.mxu0 0
        %1136 = vmatmul.mubr.bf16.gmra.mrb[0].mxu0 %v1058
        %v1137 = vpop.f32.mrb[0].mxu0
        %v1138 = vadd.f32 0.0, %v1137
        %v1139 = vpop.f32.mrb[0].mxu0
        %v1140 = vpop.f32.mrb[0].mxu0
        %v1141 = vadd.f32 0.0, %v1140
        %v1142 = vpop.f32.mrb[0].mxu0
        %1143 = vmatprep.mubr.bf16.mxu0 0
        %1144 = vmatmul.mubr.bf16.gmra.mrb[0].mxu0 %v1061
        %v1145 = vpop.f32.mrb[0].mxu0
        %v1146 = vadd.f32 0.0, %v1145
        %v1147 = vpop.f32.mrb[0].mxu0
        %v1148 = vpop.f32.mrb[0].mxu0
        %v1149 = vadd.f32 0.0, %v1148
        %v1150 = vpop.f32.mrb[0].mxu0
        %1151 = vmatprep.mubr.bf16.mxu0 0
        %1152 = vmatmul.mubr.bf16.gmra.mrb[0].mxu0 %v1064
        %v1153 = vpop.f32.mrb[0].mxu0
        %v1154 = vadd.f32 0.0, %v1153
        %v1155 = vpop.f32.mrb[0].mxu0
        %v1156 = vpop.f32.mrb[0].mxu0
        %v1157 = vadd.f32 0.0, %v1156
        %v1158 = vpop.f32.mrb[0].mxu0
        %1159 = vmatprep.mubr.bf16.mxu0 0
        %1160 = vmatmul.mubr.bf16.gmra.mrb[0].mxu0 %v1067
        %v1161 = vpop.f32.mrb[0].mxu0
        %v1162 = vadd.f32 0.0, %v1161
        %v1163 = vpop.f32.mrb[0].mxu0
        %v1164 = vpop.f32.mrb[0].mxu0
        %v1165 = vadd.f32 0.0, %v1164
        %v1166 = vpop.f32.mrb[0].mxu0
        %1167 = vmatprep.mubr.bf16.mxu0 0
        %1168 = vmatmul.mubr.bf16.gmra.mrb[0].mxu0 %v1070
        %v1169 = vpop.f32.mrb[0].mxu0
        %v1170 = vadd.f32 0.0, %v1169
        %v1171 = vpop.f32.mrb[0].mxu0
        %v1172 = vpop.f32.mrb[0].mxu0
        %v1173 = vadd.f32 0.0, %v1172
        %v1174 = vpop.f32.mrb[0].mxu0
        %1175 = vmatprep.mubr.bf16.mxu0 0
        %1176 = vmatmul.mubr.bf16.gmra.mrb[0].mxu0 %v1073
        %v1177 = vpop.f32.mrb[0].mxu0
        %v1178 = vadd.f32 0.0, %v1177
        %v1179 = vpop.f32.mrb[0].mxu0
        %v1180 = vpop.f32.mrb[0].mxu0
        %v1181 = vadd.f32 0.0, %v1180
        %v1182 = vpop.f32.mrb[0].mxu0
        %1183 = vmatprep.mubr.bf16.mxu0 0
        %1184 = vmatmul.mubr.bf16.gmra.mrb[0].mxu0 %v1076
        %v1185 = vpop.f32.mrb[0].mxu0
        %v1186 = vadd.f32 0.0, %v1185
        %v1187 = vpop.f32.mrb[0].mxu0
        %v1188 = vpop.f32.mrb[0].mxu0
        %v1189 = vadd.f32 0.0, %v1188
        %v1190 = vpop.f32.mrb[0].mxu0
        %1191 = vmatprep.mubr.bf16.mxu0 0
        %1192 = vmatmul.mubr.bf16.gmra.mrb[0].mxu0 %v1079
        %v1193 = vpop.f32.mrb[0].mxu0
        %v1194 = vadd.f32 0.0, %v1193
        %v1195 = vpop.f32.mrb[0].mxu0
        %v1196 = vpop.f32.mrb[0].mxu0
        %v1197 = vadd.f32 0.0, %v1196
        %v1198 = vpop.f32.mrb[0].mxu0
        %1199 = vmatprep.mubr.bf16.mxu0 0
        %1200 = vmatmul.mubr.bf16.gmra.mrb[0].mxu0 %v1082
        %v1201 = vpop.f32.mrb[0].mxu0
        %v1202 = vadd.f32 0.0, %v1201
        %v1203 = vpop.f32.mrb[0].mxu0
        %v1204 = vpop.f32.mrb[0].mxu0
        %v1205 = vadd.f32 0.0, %v1204
        %v1206 = vpop.f32.mrb[0].mxu0
        %1207 = vmatprep.mubr.bf16.mxu0 0
        %1208 = vmatmul.mubr.bf16.gmra.mrb[0].mxu0 %v1085
        %v1209 = vpop.f32.mrb[0].mxu0
        %v1210 = vadd.f32 0.0, %v1209
        %v1211 = vpop.f32.mrb[0].mxu0
        %v1212 = vpop.f32.mrb[0].mxu0
        %v1213 = vadd.f32 0.0, %v1212
        %v1214 = vpop.f32.mrb[0].mxu0
        %1215 = vdwg.mxu0
        %v1216 = vpack.c.bf16 %v1125, %v1122
        %v1217 = vpack.c.bf16 %v1133, %v1130
        %v1218 = vpack.c.bf16 %v1141, %v1138
        %v1219 = vpack.c.bf16 %v1149, %v1146
        %1220 = vxpose.xlu0.b32.start [1/16] %v1154, 128
        %1221 = vxpose.xlu0.b32.cont [2/16] %v1157, 128
        %1222 = vxpose.xlu0.b32.cont [3/16] %v1162, 128
        %1223 = vxpose.xlu0.b32.cont [4/16] %v1165, 128
        %1224 = vxpose.xlu0.b32.cont [5/16] %v1170, 128
        %1225 = vxpose.xlu0.b32.cont [6/16] %v1173, 128
        %1226 = vxpose.xlu0.b32.cont [7/16] %v1178, 128
        %1227 = vxpose.xlu0.b32.cont [8/16] %v1181, 128
        %1228 = vxpose.xlu0.b32.cont [9/16] 0.0, 128
        %1229 = vxpose.xlu0.b32.cont [10/16] 0.0, 128
        %1230 = vxpose.xlu0.b32.cont [11/16] 0.0, 128
        %1231 = vxpose.xlu0.b32.cont [12/16] 0.0, 128
        %1232 = vxpose.xlu0.b32.cont [13/16] 0.0, 128
        %1233 = vxpose.xlu0.b32.cont [14/16] 0.0, 128
        %1234 = vxpose.xlu0.b32.cont [15/16] 0.0, 128
        %1235 = vxpose.xlu0.b32.end [16/16] 0.0, 128
        %v1236 = vpop.trf.xlu0
        %v1237 = vpop.trf.xlu0
        %v1238 = vpop.trf.xlu0
        %v1239 = vpop.trf.xlu0
        %v1240 = vpop.trf.xlu0
        %v1241 = vpop.trf.xlu0
        %v1242 = vpop.trf.xlu0
        %v1243 = vpop.trf.xlu0
        %v1244 = vpop.trf.xlu0
        %v1245 = vpop.trf.xlu0
        %v1246 = vpop.trf.xlu0
        %v1247 = vpop.trf.xlu0
        %v1248 = vpop.trf.xlu0
        %v1249 = vpop.trf.xlu0
        %v1250 = vpop.trf.xlu0
        %v1251 = vpop.trf.xlu0
        %v1252 = vpack.c.bf16 %v1237, %v1236
        %v1253 = vpack.c.bf16 %v1239, %v1238
        %v1254 = vpack.c.bf16 %v1241, %v1240
        %v1255 = vpack.c.bf16 %v1243, %v1242
        %v1256 = vpack.c.bf16 %v1189, %v1186
        %v1257 = vpack.c.bf16 %v1197, %v1194
        %v1258 = vpack.c.bf16 %v1205, %v1202
        %v1259 = vpack.c.bf16 %v1213, %v1210
        %v1260 = vld [vmem:[%s6] sm:$0xf]
        %v1261 = vld [vmem:[%s6 + $0x4] sm:$0xf]
        %v1262 = vld [vmem:[%s6 + $0x8] sm:$0xf]
        %v1263 = vld [vmem:[%s6 + $0xc] sm:$0xf]
        %v1264 = vld [vmem:[%s6 + $0x10] sm:$0xf]
        %v1265 = vld [vmem:[%s6 + $0x14] sm:$0xf]
        %v1266 = vld [vmem:[%s6 + $0x18] sm:$0xf]
        %v1267 = vld [vmem:[%s6 + $0x1c] sm:$0xf]
        %v1268 = vld [vmem:[%s7] sm:$0xff]
        %v1269 = vld [vmem:[%s7 + $0x8] sm:$0xff]
        %v1270 = vld [vmem:[%s7 + $0x10] sm:$0xff]
        %v1271 = vld [vmem:[%s7 + $0x18] sm:$0xff]
        %v1272 = vld [vmem:[%s7 + $0x20] sm:$0xff]
        %v1273 = vld [vmem:[%s7 + $0x28] sm:$0xff]
        %v1274 = vld [vmem:[%s7 + $0x30] sm:$0xff]
        %v1275 = vld [vmem:[%s7 + $0x38] sm:$0xff]
        %v1277 = vsel %vm313, %v1252, 0
        %v1280 = vsel %vm313, %v1253, 0
        %v1283 = vsel %vm313, %v1254, 0
        %v1286 = vsel %vm313, %v1255, 0
        %1288 = vmatprep.subr.bf16.mxu0 0
        %1289 = vmatpush1.bf16.msra.mxu0 %v1216
        %1290 = vmatprep.subr.bf16.mxu0 0
        %1291 = vmatpush1.bf16.msra.mxu0 %v1217
        %1292 = vmatprep.subr.bf16.mxu0 0
        %1293 = vmatpush1.bf16.msra.mxu0 %v1218
        %1294 = vmatprep.subr.bf16.mxu0 0
        %1295 = vmatpush1.bf16.msra.mxu0 %v1219
        %1296 = vmatprep.subr.bf16.mxu0 0
        %1297 = vmatpush1.bf16.msra.mxu0 0
        %1298 = vmatprep.subr.bf16.mxu0 0
        %1299 = vmatpush1.bf16.msra.mxu0 0
        %1300 = vmatprep.subr.bf16.mxu0 0
        %1301 = vmatpush1.bf16.msra.mxu0 0
        %1302 = vmatprep.subr.bf16.mxu0 0
        %1303 = vmatpush1.bf16.msra.mxu0 0
        %1304 = vmatprep.subr.bf16.mxu0 0
        %1305 = vmatpush1.bf16.msra.mxu0 0
        %1306 = vmatprep.subr.bf16.mxu0 0
        %1307 = vmatpush1.bf16.msra.mxu0 0
        %1308 = vmatprep.subr.bf16.mxu0 0
        %1309 = vmatpush1.bf16.msra.mxu0 0
        %1310 = vmatprep.subr.bf16.mxu0 0
        %1311 = vmatpush1.bf16.msra.mxu0 0
        %1312 = vmatprep.subr.bf16.mxu0 0
        %1313 = vmatpush1.bf16.msra.mxu0 0
        %1314 = vmatprep.subr.bf16.mxu0 0
        %1315 = vmatpush1.bf16.msra.mxu0 0
        %1316 = vmatprep.subr.bf16.mxu0 0
        %1317 = vmatpush1.bf16.msra.mxu0 0
        %1318 = vmatprep.subr.bf16.mxu0 0
        %1319 = vmatpush1.bf16.msra.mxu0 0
        %1320 = vmatprep.mubr.bf16.mxu0 0
        %1321 = vmatmul.mubr.bf16.gmra.mrb[0].mxu0 %v1277
        %v1322 = vpop.f32.mrb[0].mxu0
        %v1323 = vadd.f32 0.0, %v1322
        %v1324 = vpop.f32.mrb[0].mxu0
        %v1325 = vpop.f32.mrb[0].mxu0
        %v1326 = vadd.f32 0.0, %v1325
        %v1327 = vpop.f32.mrb[0].mxu0
        %1328 = vmatprep.mubr.bf16.mxu0 0
        %1329 = vmatmul.mubr.bf16.gmra.mrb[0].mxu0 %v1280
        %v1330 = vpop.f32.mrb[0].mxu0
        %v1331 = vadd.f32 0.0, %v1330
        %v1332 = vpop.f32.mrb[0].mxu0
        %v1333 = vpop.f32.mrb[0].mxu0
        %v1334 = vadd.f32 0.0, %v1333
        %v1335 = vpop.f32.mrb[0].mxu0
        %1336 = vmatprep.mubr.bf16.mxu0 0
        %1337 = vmatmul.mubr.bf16.gmra.mrb[0].mxu0 %v1283
        %v1338 = vpop.f32.mrb[0].mxu0
        %v1339 = vadd.f32 0.0, %v1338
        %v1340 = vpop.f32.mrb[0].mxu0
        %v1341 = vpop.f32.mrb[0].mxu0
        %v1342 = vadd.f32 0.0, %v1341
        %v1343 = vpop.f32.mrb[0].mxu0
        %1344 = vmatprep.mubr.bf16.mxu0 0
        %1345 = vmatmul.mubr.bf16.gmra.mrb[0].mxu0 %v1286
        %v1346 = vpop.f32.mrb[0].mxu0
        %v1347 = vadd.f32 0.0, %v1346
        %v1348 = vpop.f32.mrb[0].mxu0
        %v1349 = vpop.f32.mrb[0].mxu0
        %v1350 = vadd.f32 0.0, %v1349
        %v1351 = vpop.f32.mrb[0].mxu0
        %1352 = vdwg.mxu0
        %v1353 = vsel %vm313, %v1323, -inf
        %v1354 = vsel %vm313, %v1326, -inf
        %v1355 = vsel %vm313, %v1331, -inf
        %v1356 = vsel %vm313, %v1334, -inf
        %v1357 = vsel %vm313, %v1339, -inf
        %v1358 = vmax.f32 %v1353, %v1357
        %v1359 = vsel %vm313, %v1342, -inf
        %v1360 = vmax.f32 %v1354, %v1359
        %v1361 = vsel %vm313, %v1347, -inf
        %v1362 = vmax.f32 %v1355, %v1361
        %v1363 = vsel %vm313, %v1350, -inf
        %v1364 = vmax.f32 %v1356, %v1363
        %v1365 = vmax.f32 %v1358, %v1360
        %v1366 = vmax.f32 %v1362, %v1364
        %v1367 = vmax.f32 %v1365, %v1366
        %v1368 = vrot.slane %v1367, 4
        %v1369 = vmax.f32 %v1367, %v1368
        %v1370 = vrot.slane %v1369, 2
        %v1371 = vmax.f32 %v1369, %v1370
        %v1372 = vrot.slane %v1371, 1
        %v1373 = vmax.f32 %v1371, %v1372
        %v1374 = vsub.f32 %v1323, %v1373
        %v1375 = vsub.f32 %v1326, %v1373
        %v1376 = vsub.f32 %v1331, %v1373
        %v1377 = vsub.f32 %v1334, %v1373
        %v1378 = vsub.f32 %v1339, %v1373
        %v1379 = vsub.f32 %v1342, %v1373
        %v1380 = vsub.f32 %v1347, %v1373
        %v1381 = vsub.f32 %v1350, %v1373
        %v1382 = vmul.f32 %v1374, 1.442695
        %v1383 = vpow.pop %v1382
        %v1384 = vmul.f32 %v1375, 1.442695
        %v1385 = vpow.pop %v1384
        %v1386 = vmul.f32 %v1376, 1.442695
        %v1387 = vpow.pop %v1386
        %v1388 = vmul.f32 %v1377, 1.442695
        %v1389 = vpow.pop %v1388
        %v1390 = vmul.f32 %v1378, 1.442695
        %v1391 = vpow.pop %v1390
        %v1392 = vmul.f32 %v1379, 1.442695
        %v1393 = vpow.pop %v1392
        %v1394 = vmul.f32 %v1380, 1.442695
        %v1395 = vpow.pop %v1394
        %v1396 = vmul.f32 %v1381, 1.442695
        %v1397 = vpow.pop %v1396
        %v1398 = vsel %vm313, %v1383, 0.0
        %v1399 = vsel %vm313, %v1385, 0.0
        %v1400 = vadd.f32 %v1398, %v1399
        %v1401 = vsel %vm313, %v1387, 0.0
        %v1402 = vadd.f32 %v1400, %v1401
        %v1403 = vsel %vm313, %v1389, 0.0
        %v1404 = vadd.f32 %v1402, %v1403
        %v1405 = vsel %vm313, %v1391, 0.0
        %v1406 = vadd.f32 %v1404, %v1405
        %v1407 = vsel %vm313, %v1393, 0.0
        %v1408 = vadd.f32 %v1406, %v1407
        %v1409 = vsel %vm313, %v1395, 0.0
        %v1410 = vadd.f32 %v1408, %v1409
        %v1411 = vsel %vm313, %v1397, 0.0
        %v1412 = vadd.f32 %v1410, %v1411
        %v1413 = vrot.slane %v1412, 4
        %v1414 = vadd.f32 %v1412, %v1413
        %v1415 = vrot.slane %v1414, 2
        %v1416 = vadd.f32 %v1414, %v1415
        %v1417 = vrot.slane %v1416, 1
        %v1418 = vadd.f32 %v1416, %v1417
        %v1419 = vrcp.pop %v1418
        %v1420 = vmul.f32 %v1383, %v1419
        %v1421 = vmul.f32 %v1385, %v1419
        %v1422 = vmul.f32 %v1387, %v1419
        %v1423 = vmul.f32 %v1389, %v1419
        %v1424 = vmul.f32 %v1391, %v1419
        %v1425 = vmul.f32 %v1393, %v1419
        %v1426 = vmul.f32 %v1395, %v1419
        %v1427 = vmul.f32 %v1397, %v1419
        %v1428 = vpack.c.bf16 %v1421, %v1420
        %v1429 = vpack.c.bf16 %v1423, %v1422
        %v1430 = vpack.c.bf16 %v1425, %v1424
        %v1431 = vpack.c.bf16 %v1427, %v1426
        %v1433 = vsel %vm313, %v1256, 0
        %v1436 = vsel %vm313, %v1257, 0
        %v1439 = vsel %vm313, %v1258, 0
        %v1442 = vsel %vm313, %v1259, 0
        %1444 = vmatprep.subr.bf16.mxu0 0
        %1445 = vmatpush1.bf16.msra.mxu0 %v1428
        %1446 = vmatprep.subr.bf16.mxu0 0
        %1447 = vmatpush1.bf16.msra.mxu0 %v1429
        %1448 = vmatprep.subr.bf16.mxu0 0
        %1449 = vmatpush1.bf16.msra.mxu0 %v1430
        %1450 = vmatprep.subr.bf16.mxu0 0
        %1451 = vmatpush1.bf16.msra.mxu0 %v1431
        %1452 = vmatprep.subr.bf16.mxu0 0
        %1453 = vmatpush1.bf16.msra.mxu0 0
        %1454 = vmatprep.subr.bf16.mxu0 0
        %1455 = vmatpush1.bf16.msra.mxu0 0
        %1456 = vmatprep.subr.bf16.mxu0 0
        %1457 = vmatpush1.bf16.msra.mxu0 0
        %1458 = vmatprep.subr.bf16.mxu0 0
        %1459 = vmatpush1.bf16.msra.mxu0 0
        %1460 = vmatprep.subr.bf16.mxu0 0
        %1461 = vmatpush1.bf16.msra.mxu0 0
        %1462 = vmatprep.subr.bf16.mxu0 0
        %1463 = vmatpush1.bf16.msra.mxu0 0
        %1464 = vmatprep.subr.bf16.mxu0 0
        %1465 = vmatpush1.bf16.msra.mxu0 0
        %1466 = vmatprep.subr.bf16.mxu0 0
        %1467 = vmatpush1.bf16.msra.mxu0 0
        %1468 = vmatprep.subr.bf16.mxu0 0
        %1469 = vmatpush1.bf16.msra.mxu0 0
        %1470 = vmatprep.subr.bf16.mxu0 0
        %1471 = vmatpush1.bf16.msra.mxu0 0
        %1472 = vmatprep.subr.bf16.mxu0 0
        %1473 = vmatpush1.bf16.msra.mxu0 0
        %1474 = vmatprep.subr.bf16.mxu0 0
        %1475 = vmatpush1.bf16.msra.mxu0 0
        %1476 = vmatprep.mubr.bf16.mxu0 0
        %1477 = vmatmul.mubr.bf16.gmra.mrb[0].mxu0 %v1433
        %v1478 = vpop.f32.mrb[0].mxu0
        %v1479 = vadd.f32 0.0, %v1478
        %v1480 = vpop.f32.mrb[0].mxu0
        %v1481 = vpop.f32.mrb[0].mxu0
        %v1482 = vadd.f32 0.0, %v1481
        %v1483 = vpop.f32.mrb[0].mxu0
        %1484 = vmatprep.mubr.bf16.mxu0 0
        %1485 = vmatmul.mubr.bf16.gmra.mrb[0].mxu0 %v1436
        %v1486 = vpop.f32.mrb[0].mxu0
        %v1487 = vadd.f32 0.0, %v1486
        %v1488 = vpop.f32.mrb[0].mxu0
        %v1489 = vpop.f32.mrb[0].mxu0
        %v1490 = vadd.f32 0.0, %v1489
        %v1491 = vpop.f32.mrb[0].mxu0
        %1492 = vmatprep.mubr.bf16.mxu0 0
        %1493 = vmatmul.mubr.bf16.gmra.mrb[0].mxu0 %v1439
        %v1494 = vpop.f32.mrb[0].mxu0
        %v1495 = vadd.f32 0.0, %v1494
        %v1496 = vpop.f32.mrb[0].mxu0
        %v1497 = vpop.f32.mrb[0].mxu0
        %v1498 = vadd.f32 0.0, %v1497
        %v1499 = vpop.f32.mrb[0].mxu0
        %1500 = vmatprep.mubr.bf16.mxu0 0
        %1501 = vmatmul.mubr.bf16.gmra.mrb[0].mxu0 %v1442
        %v1502 = vpop.f32.mrb[0].mxu0
        %v1503 = vadd.f32 0.0, %v1502
        %v1504 = vpop.f32.mrb[0].mxu0
        %v1505 = vpop.f32.mrb[0].mxu0
        %v1506 = vadd.f32 0.0, %v1505
        %v1507 = vpop.f32.mrb[0].mxu0
        %1508 = vdwg.mxu0
        %v1509 = vpack.c.bf16 %v1482, %v1479
        %v1510 = vpack.c.bf16 %v1490, %v1487
        %v1511 = vpack.c.bf16 %v1498, %v1495
        %v1512 = vpack.c.bf16 %v1506, %v1503
        %1513 = vst.msk [vmem:[#allocation2] sm:$0xff] %vm313, %v1509
        %1514 = vst.msk [vmem:[#allocation2 + $0x8] sm:$0xff] %vm313, %v1510
        %1515 = vst.msk [vmem:[#allocation2 + $0x10] sm:$0xff] %vm313, %v1511
        %1516 = vst.msk [vmem:[#allocation2 + $0x18] sm:$0xff] %vm313, %v1512
        %v1517 = vld [vmem:[#allocation2] sm:$0xff]
        %v1518 = vld [vmem:[#allocation2 + $0x8] sm:$0xff]
        %v1519 = vld [vmem:[#allocation2 + $0x10] sm:$0xff]
        %v1520 = vld [vmem:[#allocation2 + $0x18] sm:$0xff]
        %1522 = vset.pattern.permute.xlu0 0
        %1523 = vperm.xlu0 %1522, %v1268
        %v1524 = vpop.permute.xlu0 %1523
        %1527 = vset.pattern.permute.xlu0 0
        %1528 = vperm.xlu0 %1527, %v1269
        %v1529 = vpop.permute.xlu0 %1528
        %1532 = vset.pattern.permute.xlu0 0
        %1533 = vperm.xlu0 %1532, %v1270
        %v1534 = vpop.permute.xlu0 %1533
        %1537 = vset.pattern.permute.xlu0 0
        %1538 = vperm.xlu0 %1537, %v1271
        %v1539 = vpop.permute.xlu0 %1538
        %1542 = vset.pattern.permute.xlu0 0
        %1543 = vperm.xlu0 %1542, %v1272
        %v1544 = vpop.permute.xlu0 %1543
        %1547 = vset.pattern.permute.xlu0 0
        %1548 = vperm.xlu0 %1547, %v1273
        %v1549 = vpop.permute.xlu0 %1548
        %1552 = vset.pattern.permute.xlu0 0
        %1553 = vperm.xlu0 %1552, %v1274
        %v1554 = vpop.permute.xlu0 %1553
        %1557 = vset.pattern.permute.xlu0 0
        %1558 = vperm.xlu0 %1557, %v1275
        %v1559 = vpop.permute.xlu0 %1558
        %v1569 = vunpack.c.l.b16 %v1260
        %v1570 = vunpack.c.l.b16 %v1261
        %v1571 = vunpack.c.l.b16 %v1262
        %v1572 = vunpack.c.l.b16 %v1263
        %v1573 = vunpack.c.l.b16 %v1264
        %v1574 = vunpack.c.l.b16 %v1265
        %v1575 = vunpack.c.l.b16 %v1266
        %v1576 = vunpack.c.l.b16 %v1267
        %v1577 = vpack.c.b16 %v1570, %v1569
        %v1578 = vpack.c.b16 %v1572, %v1571
        %v1579 = vpack.c.b16 %v1574, %v1573
        %v1580 = vpack.c.b16 %v1576, %v1575
        %v1582 = vsel %vm313, %v1577, 0
        %v1585 = vsel %vm313, %v1578, 0
        %v1588 = vsel %vm313, %v1579, 0
        %v1591 = vsel %vm313, %v1580, 0
        %1593 = vmatprep.subr.bf16.mxu0 0
        %1594 = vmatpush1.bf16.msra.mxu0 %v1517
        %1595 = vmatprep.subr.bf16.mxu0 0
        %1596 = vmatpush1.bf16.msra.mxu0 %v1518
        %1597 = vmatprep.subr.bf16.mxu0 0
        %1598 = vmatpush1.bf16.msra.mxu0 %v1519
        %1599 = vmatprep.subr.bf16.mxu0 0
        %1600 = vmatpush1.bf16.msra.mxu0 %v1520
        %1601 = vmatprep.subr.bf16.mxu0 0
        %1602 = vmatpush1.bf16.msra.mxu0 0
        %1603 = vmatprep.subr.bf16.mxu0 0
        %1604 = vmatpush1.bf16.msra.mxu0 0
        %1605 = vmatprep.subr.bf16.mxu0 0
        %1606 = vmatpush1.bf16.msra.mxu0 0
        %1607 = vmatprep.subr.bf16.mxu0 0
        %1608 = vmatpush1.bf16.msra.mxu0 0
        %1609 = vmatprep.subr.bf16.mxu0 0
        %1610 = vmatpush1.bf16.msra.mxu0 0
        %1611 = vmatprep.subr.bf16.mxu0 0
        %1612 = vmatpush1.bf16.msra.mxu0 0
        %1613 = vmatprep.subr.bf16.mxu0 0
        %1614 = vmatpush1.bf16.msra.mxu0 0
        %1615 = vmatprep.subr.bf16.mxu0 0
        %1616 = vmatpush1.bf16.msra.mxu0 0
        %1617 = vmatprep.subr.bf16.mxu0 0
        %1618 = vmatpush1.bf16.msra.mxu0 0
        %1619 = vmatprep.subr.bf16.mxu0 0
        %1620 = vmatpush1.bf16.msra.mxu0 0
        %1621 = vmatprep.subr.bf16.mxu0 0
        %1622 = vmatpush1.bf16.msra.mxu0 0
        %1623 = vmatprep.subr.bf16.mxu0 0
        %1624 = vmatpush1.bf16.msra.mxu0 0
        %1625 = vmatprep.mubr.bf16.mxu0 0
        %1626 = vmatmul.mubr.bf16.gmra.mrb[0].mxu0 %v1582
        %v1627 = vpop.f32.mrb[0].mxu0
        %v1628 = vadd.f32 %v1524, %v1627
        %v1629 = vpop.f32.mrb[0].mxu0
        %v1630 = vpop.f32.mrb[0].mxu0
        %v1631 = vadd.f32 %v1529, %v1630
        %v1632 = vpop.f32.mrb[0].mxu0
        %1633 = vmatprep.mubr.bf16.mxu0 0
        %1634 = vmatmul.mubr.bf16.gmra.mrb[0].mxu0 %v1585
        %v1635 = vpop.f32.mrb[0].mxu0
        %v1636 = vadd.f32 %v1534, %v1635
        %v1637 = vpop.f32.mrb[0].mxu0
        %v1638 = vpop.f32.mrb[0].mxu0
        %v1639 = vadd.f32 %v1539, %v1638
        %v1640 = vpop.f32.mrb[0].mxu0
        %1641 = vmatprep.mubr.bf16.mxu0 0
        %1642 = vmatmul.mubr.bf16.gmra.mrb[0].mxu0 %v1588
        %v1643 = vpop.f32.mrb[0].mxu0
        %v1644 = vadd.f32 %v1544, %v1643
        %v1645 = vpop.f32.mrb[0].mxu0
        %v1646 = vpop.f32.mrb[0].mxu0
        %v1647 = vadd.f32 %v1549, %v1646
        %v1648 = vpop.f32.mrb[0].mxu0
        %1649 = vmatprep.mubr.bf16.mxu0 0
        %1650 = vmatmul.mubr.bf16.gmra.mrb[0].mxu0 %v1591
        %v1651 = vpop.f32.mrb[0].mxu0
        %v1652 = vadd.f32 %v1554, %v1651
        %v1653 = vpop.f32.mrb[0].mxu0
        %v1654 = vpop.f32.mrb[0].mxu0
        %v1655 = vadd.f32 %v1559, %v1654
        %v1656 = vpop.f32.mrb[0].mxu0
        %1657 = vdwg.mxu0
        %v1658 = vadd.f32 %v1628, %v305
        %v1659 = vadd.f32 %v1631, %v306
        %v1660 = vadd.f32 %v1636, %v307
        %v1661 = vadd.f32 %v1639, %v308
        %v1662 = vadd.f32 %v1644, %v309
        %v1663 = vadd.f32 %v1647, %v310
        %v1664 = vadd.f32 %v1652, %v311
        %v1665 = vadd.f32 %v1655, %v312
        %1666 = vst.msk [vmem:[%s298] sm:$0xff] %vm313, %v1658
        %1667 = vst.msk [vmem:[%s298 + $0x8] sm:$0xff] %vm313, %v1659
        %1668 = vst.msk [vmem:[%s298 + $0x10] sm:$0xff] %vm313, %v1660
        %1669 = vst.msk [vmem:[%s298 + $0x18] sm:$0xff] %vm313, %v1661
        %1670 = vst.msk [vmem:[%s298 + $0x20] sm:$0xff] %vm313, %v1662
        %1671 = vst.msk [vmem:[%s298 + $0x28] sm:$0xff] %vm313, %v1663
        %1672 = vst.msk [vmem:[%s298 + $0x30] sm:$0xff] %vm313, %v1664
        %1673 = vst.msk [vmem:[%s298 + $0x38] sm:$0xff] %vm313, %v1665
        %s1674 = sand.u32 %s203, 1
        %s1675 = scalar_lea.sflag [#allocation4], %s1674
        %s1676 = sand.u32 %s203, 1
        %s1677 = smul.addr %s1676, 64
        %s1678 = scalar_lea.vmem [#allocation3], %s1677
        // Predicated region
        $region53: #{tpu_custom_call.1} parent=51 // pred_check
          %p1679 = pneg %p213
        $region54: #{tpu_custom_call.1} parent=51 // pred_check_branch
          %1681 = sbr.rel (%p1679) target = $region56
        $region55: #{tpu_custom_call.1} parent=51 // pred_region
          %s1683 = ssub.s32 1024, 1024
          %1684 = vsyncadd %s1675, %s1683
          %s1685 = smul.addr %s22, 8
          %s1686 = smul.addr %s1685, 128
          %s1687 = scalar_lea.hbm %s8, %s1686
          %s1688 = sshll.u32 %s1678, 4
          %s1689 = int_to_ptr.vmem [resolvable:$true] %s1688
          %1694 = dma.vmem_to_hbm [thread:$0]  %s1689, 1024, %s1687, %s1675, 128, 128, 8
        $region56: #{tpu_custom_call.1} parent=51 // pred_fallthru
          _
      $region52: #{tpu_custom_call.1} parent=5 // pred_fallthru
        _
      %p1695 = scmp.le.s32.totalorder 2, %s17
      // Predicated region
      $region57: #{tpu_custom_call.1} parent=5 // pred_check
        %p1696 = pneg %p1695
      $region58: #{tpu_custom_call.1} parent=5 // pred_check_branch
        %1698 = sbr.rel (%p1696) target = $region60
      $region59: #{tpu_custom_call.1} parent=5 // pred_region
        %s1699 = ssub.s32 %s17, 2
        // Predicated region
        $region61: #{tpu_custom_call.1} parent=59 // pred_check
          %p1700 = pneg %p219
        $region62: #{tpu_custom_call.1} parent=59 // pred_check_branch
          %1702 = sbr.rel (%p1700) target = $region64
        $region63: #{tpu_custom_call.1} parent=59 // pred_region
          %s1703 = sand.u32 %s204, 1
          %s1704 = scalar_lea.sflag [#allocation4], %s1703
          %s1705 = sand.u32 %s204, 1
          %s1706 = smul.addr %s1705, 64
          %s1707 = scalar_lea.vmem [#allocation3], %s1706
          %1708 = dma.done %s1704, 1024
        $region64: #{tpu_custom_call.1} parent=59 // pred_fallthru
          _
      $region60: #{tpu_custom_call.1} parent=5 // pred_fallthru
        _
    $region6: #{tpu_custom_call.1} parent=1 // loop_footer
      %s21 = sadd.s32 1, %s17
    $region7: #{tpu_custom_call.1} parent=1 // loop_footer_branch
      %16 = sbr.rel target = $region3
    $region8: #{tpu_custom_call.1} parent=1 // loop_exit
      _
    %1709 = vsyncpa [#allocation4], 1
    %s1710 = scalar_lea.sflag [#allocation4], 1
    %1711 = vsyncpa %s1710, 1

</llo_original>
